<compile_context>
chip_gen: v7x
topology: tpu7x:2x2x1
jax: 0.10.0
libtpu: 0.0.40
codegen_flags: <defaults>
</compile_context>

<pallas_src>
import functools

import jax
import jax.numpy as jnp
from jax.experimental import pallas as pl
from jax.experimental.pallas import tpu as pltpu

Z_DIM = 32
H1 = 144
H2 = 256
OUT_DIM = 784

# Lane/MXU-aligned padded dims (zero padding is numerically exact, see header).
H1_PAD = 256          # 144 -> 256
OUT_PAD = 896         # 784 -> 7 * 128 (lane-dense, unmasked output stores)


def _cdiv(a, b):
    return -(-a // b)


def _round_up(x, m):
    return ((x + m - 1) // m) * m


def _bf16_epilogue_default():
    # bf16 VPU/EUP exists on v6e/v7x; v5e and older keep the f32 epilogue.
    try:
        kind = jax.devices()[0].device_kind.lower()
    except Exception:
        return False
    return ("v6" in kind) or ("v7" in kind)


def decoder_kernel(x_ref, w1_ref, b1_ref, w2_ref, b2_ref, w3_ref, b3_ref, o_ref,
                   *, bf16_epilogue):
    # Layer 1: (TB, Z) @ (Z, H1_PAD) + b1 -> ReLU   (bf16 MXU, f32 accumulate)
    h1 = jnp.dot(x_ref[...].astype(jnp.bfloat16), w1_ref[...],
                 preferred_element_type=jnp.float32)
    h1 = jnp.maximum(h1 + b1_ref[...], 0.0)
    # Layer 2: (TB, H1_PAD) @ (H1_PAD, H2) + b2 -> ReLU
    h2 = jnp.dot(h1.astype(jnp.bfloat16), w2_ref[...],
                 preferred_element_type=jnp.float32)
    h2 = jnp.maximum(h2 + b2_ref[...], 0.0)
    # Layer 3: (TB, H2) @ (H2, OUT_PAD) + b3 -> Sigmoid
    # (w3 and b3 are pre-scaled by 0.5 at prep time)
    h3 = jnp.dot(h2.astype(jnp.bfloat16), w3_ref[...],
                 preferred_element_type=jnp.float32)
    h3 = h3 + b3_ref[...]
    if bf16_epilogue:
        h3 = h3.astype(jnp.bfloat16)   # packed vregs; bf16 EUP tanh on v6e/v7x
    # sigmoid(y) == 0.5*tanh(0.5*y)+0.5 ; the inner 0.5*y is folded into w3/b3.
    out = 0.5 * jnp.tanh(h3) + 0.5
    o_ref[...] = out.astype(o_ref.dtype)


def prepare_params(params):
    """One-time prep (out of the hot path): pad to lane/MXU-aligned shapes,
    cast matmul weights to bf16, fold the sigmoid 0.5 pre-scale into w3/b3."""
    w1 = jnp.pad(params["w1"], ((0, 0), (0, H1_PAD - H1))).astype(jnp.bfloat16)
    b1 = jnp.pad(params["b1"], ((0, 0), (0, H1_PAD - H1))).astype(jnp.float32)
    w2 = jnp.pad(params["w2"], ((0, H1_PAD - H1), (0, 0))).astype(jnp.bfloat16)
    b2 = params["b2"].astype(jnp.float32)
    w3 = jnp.pad(params["w3"] * 0.5, ((0, 0), (0, OUT_PAD - OUT_DIM))).astype(jnp.bfloat16)
    b3 = jnp.pad(params["b3"] * 0.5, ((0, 0), (0, OUT_PAD - OUT_DIM))).astype(jnp.float32)
    return {"w1": w1, "b1": b1, "w2": w2, "b2": b2, "w3": w3, "b3": b3}


def decoder_forward(x, prepared, *, tile_b=512, out_dtype=jnp.float32,
                    bf16_epilogue=None):
    """x: (B, Z_DIM) float32.  prepared: output of prepare_params()."""
    B = x.shape[0]
    if bf16_epilogue is None:
        bf16_epilogue = _bf16_epilogue_default()

    # --- batch tiling: minimise padding waste, keep both v7x TCs busy --------
    n_tiles = max(1, _cdiv(B, tile_b))
    if B >= 16:
        n_tiles = max(n_tiles, 2)          # >=2 grid steps for v7x megacore
    tb = _round_up(_cdiv(B, n_tiles), 8)
    B_pad = n_tiles * tb
    if B_pad != B:
        x = jnp.pad(x, ((0, B_pad - B), (0, 0)))
    grid = (n_tiles,)

    w1, b1 = prepared["w1"], prepared["b1"]
    w2, b2 = prepared["w2"], prepared["b2"]
    w3, b3 = prepared["w3"], prepared["b3"]

    full = lambda arr: pl.BlockSpec(arr.shape, lambda i: (0, 0))

    flops = 2 * B_pad * (Z_DIM * H1_PAD + H1_PAD * H2 + H2 * OUT_PAD)
    bytes_accessed = (
        4 * B_pad * Z_DIM                                   # x (f32 in)
        + 2 * (w1.size + w2.size + w3.size)                 # bf16 weights
        + 4 * (b1.size + b2.size + b3.size)                 # f32 biases
        + jnp.dtype(out_dtype).itemsize * B_pad * OUT_PAD   # output
    )
    cost = pl.CostEstimate(
        flops=flops,
        transcendentals=B_pad * OUT_PAD,
        bytes_accessed=bytes_accessed,
    )

    out = pl.pallas_call(
        functools.partial(decoder_kernel, bf16_epilogue=bf16_epilogue),
        out_shape=jax.ShapeDtypeStruct((B_pad, OUT_PAD), out_dtype),
        grid_spec=pltpu.PrefetchScalarGridSpec(
            num_scalar_prefetch=0,
            grid=grid,
            in_specs=[
                pl.BlockSpec((tb, Z_DIM), lambda i: (i, 0)),   # x (batch-tiled)
                full(w1), full(b1),
                full(w2), full(b2),
                full(w3), full(b3),
            ],
            out_specs=pl.BlockSpec((tb, OUT_PAD), lambda i: (i, 0)),
        ),
        compiler_params=pltpu.CompilerParams(
            dimension_semantics=("parallel",),   # shards batch across TCs on v7x
        ),
        cost_estimate=cost,
    )(x, w1, b1, w2, b2, w3, b3)

    # strip batch and output-feature padding
    return out[:B, :OUT_DIM]


def init_params(key):
    """Deterministic init matching nn.Linear default: U(-1/sqrt(fan_in), 1/sqrt(fan_in))."""
    ks = jax.random.split(key, 6)

    def linear(kw, kb, fan_in, fan_out):
        bound = 1.0 / jnp.sqrt(jnp.float32(fan_in))
        # stored as (in, out) so kernel does x @ W
        w = jax.random.uniform(kw, (fan_in, fan_out), jnp.float32, -bound, bound)
        b = jax.random.uniform(kb, (1, fan_out), jnp.float32, -bound, bound)
        return w, b

    w1, b1 = linear(ks[0], ks[1], Z_DIM, H1)
    w2, b2 = linear(ks[2], ks[3], H1, H2)
    w3, b3 = linear(ks[4], ks[5], H2, OUT_DIM)
    return {"w1": w1, "b1": b1, "w2": w2, "b2": b2, "w3": w3, "b3": b3}


def decoder_ref(x, p):
    h = jnp.maximum(x @ p["w1"] + p["b1"], 0.0)
    h = jnp.maximum(h @ p["w2"] + p["b2"], 0.0)
    return jax.nn.sigmoid(h @ p["w3"] + p["b3"])


if __name__ == "__main__":
    key = jax.random.PRNGKey(0)
    k_param, k_x = jax.random.split(key)

    params = init_params(k_param)
    prepared = prepare_params(params)   # one-time: pad + bf16 + 0.5-fold

    B = 16
    x = jax.random.normal(k_x, (B, Z_DIM), jnp.float32)

    out = decoder_forward(x, prepared)
    out = jax.block_until_ready(out)

    # sanity check against the pure-JAX f32 reference; tolerance relaxed because
    # the matmul path now runs bf16 on the MXU (f32 accumulation).
    ref = decoder_ref(x, params)
    assert out.shape == (B, OUT_DIM)
    err = float(jnp.max(jnp.abs(out - ref)))
    assert err < 2e-2, err

    print("KERNEL_OK")
</pallas_src>

<mosaic_0001>
module attributes {stable_mosaic.version = 11 : i64} {
  func.func @decoder_kernel(%arg0: i32, %arg1: memref<8x32xf32, #tpu.memory_space<vmem>>, %arg2: memref<32x256xbf16, #tpu.memory_space<vmem>>, %arg3: memref<1x256xf32, #tpu.memory_space<vmem>>, %arg4: memref<256x256xbf16, #tpu.memory_space<vmem>>, %arg5: memref<1x256xf32, #tpu.memory_space<vmem>>, %arg6: memref<256x896xbf16, #tpu.memory_space<vmem>>, %arg7: memref<1x896xf32, #tpu.memory_space<vmem>>, %arg8: memref<8x896xf32, #tpu.memory_space<vmem>>) attributes {dimension_semantics = [#tpu.dimension_semantics<parallel>], iteration_bounds = array<i64: 2>, scalar_prefetch = 0 : i64, scratch_operands = 0 : i64, tpu.core_type = #tpu.core_type<tc>, window_params = [{transform_indices = @transform_0, window_bounds = array<i64: 8, 32>}, {pipeline_mode = #tpu.pipeline_mode<synchronous>, transform_indices = @transform_1, window_bounds = array<i64: 32, 256>}, {pipeline_mode = #tpu.pipeline_mode<synchronous>, transform_indices = @transform_2, window_bounds = array<i64: 1, 256>}, {pipeline_mode = #tpu.pipeline_mode<synchronous>, transform_indices = @transform_3, window_bounds = array<i64: 256, 256>}, {pipeline_mode = #tpu.pipeline_mode<synchronous>, transform_indices = @transform_4, window_bounds = array<i64: 1, 256>}, {pipeline_mode = #tpu.pipeline_mode<synchronous>, transform_indices = @transform_5, window_bounds = array<i64: 256, 896>}, {pipeline_mode = #tpu.pipeline_mode<synchronous>, transform_indices = @transform_6, window_bounds = array<i64: 1, 896>}, {transform_indices = @transform_7, window_bounds = array<i64: 8, 896>}]} {
    %c0 = arith.constant 0 : index
    %c0_0 = arith.constant 0 : index
    %0 = vector.load %arg1[%c0, %c0_0] : memref<8x32xf32, #tpu.memory_space<vmem>>, vector<8x32xf32>
    %1 = arith.truncf %0 : vector<8x32xf32> to vector<8x32xbf16>
    %c0_1 = arith.constant 0 : index
    %c0_2 = arith.constant 0 : index
    %2 = vector.load %arg2[%c0_1, %c0_2] : memref<32x256xbf16, #tpu.memory_space<vmem>>, vector<32x256xbf16>
    %cst = arith.constant dense<0.000000e+00> : vector<8x256xf32>
    %3 = tpu.matmul %1, %2, %cst {dimension_numbers = #tpu.dot_dimension_numbers<[1], [0], [0], [1], [0, 0, 1, 1], [], []>} : vector<8x32xbf16>, vector<32x256xbf16>, vector<8x256xf32> -> vector<8x256xf32>
    %c0_3 = arith.constant 0 : index
    %c0_4 = arith.constant 0 : index
    %4 = vector.load %arg3[%c0_3, %c0_4] : memref<1x256xf32, #tpu.memory_space<vmem>>, vector<1x256xf32>
    %5 = vector.broadcast %4 : vector<1x256xf32> to vector<8x256xf32>
    %6 = arith.addf %3, %5 : vector<8x256xf32>
    %cst_5 = arith.constant 0.000000e+00 : f32
    %7 = vector.broadcast %cst_5 : f32 to vector<8x256xf32>
    %8 = arith.maximumf %6, %7 : vector<8x256xf32>
    %9 = arith.truncf %8 : vector<8x256xf32> to vector<8x256xbf16>
    %c0_6 = arith.constant 0 : index
    %c0_7 = arith.constant 0 : index
    %10 = vector.load %arg4[%c0_6, %c0_7] : memref<256x256xbf16, #tpu.memory_space<vmem>>, vector<256x256xbf16>
    %cst_8 = arith.constant dense<0.000000e+00> : vector<8x256xf32>
    %11 = tpu.matmul %9, %10, %cst_8 {dimension_numbers = #tpu.dot_dimension_numbers<[1], [0], [0], [1], [0, 0, 1, 1], [], []>} : vector<8x256xbf16>, vector<256x256xbf16>, vector<8x256xf32> -> vector<8x256xf32>
    %c0_9 = arith.constant 0 : index
    %c0_10 = arith.constant 0 : index
    %12 = vector.load %arg5[%c0_9, %c0_10] : memref<1x256xf32, #tpu.memory_space<vmem>>, vector<1x256xf32>
    %13 = vector.broadcast %12 : vector<1x256xf32> to vector<8x256xf32>
    %14 = arith.addf %11, %13 : vector<8x256xf32>
    %cst_11 = arith.constant 0.000000e+00 : f32
    %15 = vector.broadcast %cst_11 : f32 to vector<8x256xf32>
    %16 = arith.maximumf %14, %15 : vector<8x256xf32>
    %17 = arith.truncf %16 : vector<8x256xf32> to vector<8x256xbf16>
    %c0_12 = arith.constant 0 : index
    %c0_13 = arith.constant 0 : index
    %18 = vector.load %arg6[%c0_12, %c0_13] : memref<256x896xbf16, #tpu.memory_space<vmem>>, vector<256x896xbf16>
    %cst_14 = arith.constant dense<0.000000e+00> : vector<8x896xf32>
    %19 = tpu.matmul %17, %18, %cst_14 {dimension_numbers = #tpu.dot_dimension_numbers<[1], [0], [0], [1], [0, 0, 1, 1], [], []>} : vector<8x256xbf16>, vector<256x896xbf16>, vector<8x896xf32> -> vector<8x896xf32>
    %c0_15 = arith.constant 0 : index
    %c0_16 = arith.constant 0 : index
    %20 = vector.load %arg7[%c0_15, %c0_16] : memref<1x896xf32, #tpu.memory_space<vmem>>, vector<1x896xf32>
    %21 = vector.broadcast %20 : vector<1x896xf32> to vector<8x896xf32>
    %22 = arith.addf %19, %21 : vector<8x896xf32>
    %23 = math.tanh %22 : vector<8x896xf32>
    %cst_17 = arith.constant 5.000000e-01 : f32
    %24 = vector.broadcast %cst_17 : f32 to vector<8x896xf32>
    %25 = arith.mulf %24, %23 : vector<8x896xf32>
    %cst_18 = arith.constant 5.000000e-01 : f32
    %26 = vector.broadcast %cst_18 : f32 to vector<8x896xf32>
    %27 = arith.addf %25, %26 : vector<8x896xf32>
    %c0_19 = arith.constant 0 : index
    %c0_20 = arith.constant 0 : index
    %28 = vector.load %arg8[%c0_19, %c0_20] : memref<8x896xf32, #tpu.memory_space<vmem>>, vector<8x896xf32>
    tpu.vector_store %arg8[%c0_19, %c0_20], %27 {strides = array<i32>} : memref<8x896xf32, #tpu.memory_space<vmem>>, vector<8x896xf32>,
    return
  }
  func.func @transform_0(%arg0: i32) -> (i32, i32) {
    %c0_i32 = arith.constant 0 : i32
    %c0_i32_0 = arith.constant 0 : i32
    return %arg0, %c0_i32 : i32, i32
  }
  func.func @transform_1(%arg0: i32) -> (i32, i32) {
    %c0_i32 = arith.constant 0 : i32
    %c0_i32_0 = arith.constant 0 : i32
    %c0_i32_1 = arith.constant 0 : i32
    return %c0_i32, %c0_i32_0 : i32, i32
  }
  func.func @transform_2(%arg0: i32) -> (i32, i32) {
    %c0_i32 = arith.constant 0 : i32
    %c0_i32_0 = arith.constant 0 : i32
    %c0_i32_1 = arith.constant 0 : i32
    return %c0_i32, %c0_i32_0 : i32, i32
  }
  func.func @transform_3(%arg0: i32) -> (i32, i32) {
    %c0_i32 = arith.constant 0 : i32
    %c0_i32_0 = arith.constant 0 : i32
    %c0_i32_1 = arith.constant 0 : i32
    return %c0_i32, %c0_i32_0 : i32, i32
  }
  func.func @transform_4(%arg0: i32) -> (i32, i32) {
    %c0_i32 = arith.constant 0 : i32
    %c0_i32_0 = arith.constant 0 : i32
    %c0_i32_1 = arith.constant 0 : i32
    return %c0_i32, %c0_i32_0 : i32, i32
  }
  func.func @transform_5(%arg0: i32) -> (i32, i32) {
    %c0_i32 = arith.constant 0 : i32
    %c0_i32_0 = arith.constant 0 : i32
    %c0_i32_1 = arith.constant 0 : i32
    return %c0_i32, %c0_i32_0 : i32, i32
  }
  func.func @transform_6(%arg0: i32) -> (i32, i32) {
    %c0_i32 = arith.constant 0 : i32
    %c0_i32_0 = arith.constant 0 : i32
    %c0_i32_1 = arith.constant 0 : i32
    return %c0_i32, %c0_i32_0 : i32, i32
  }
  func.func @transform_7(%arg0: i32) -> (i32, i32) {
    %c0_i32 = arith.constant 0 : i32
    %c0_i32_0 = arith.constant 0 : i32
    return %arg0, %c0_i32 : i32, i32
  }
}

</mosaic_0001>

<llo_original>
// kernel: tpu_custom_call.1
$region0: #{tpu_custom_call.1}
  #allocation0 [shape = 'u32[]', space=smem, size = 0x4, offset = 0x4, fixed_abs, tag = 'smem constant byte address 0x4 - core index']
  #allocation1 [shape = 'u32[144,128]{1,0:T(1,128)}', space=vmem, size = 0x12000, scoped, tag = 'internal scratch']
  %s0 = inlined_call_operand.hbm [shape: f32[16,32], index: 0, kind: input, shape index: {}]
  %s1 = inlined_call_operand.hbm [shape: bf16[32,256], index: 1, kind: input, shape index: {}]
  %s2 = inlined_call_operand.vmem [shape: f32[1,256], index: 2, kind: input, shape index: {}]
  %s3 = inlined_call_operand.hbm [shape: bf16[256,256], index: 3, kind: input, shape index: {}]
  %s4 = inlined_call_operand.vmem [shape: f32[1,256], index: 4, kind: input, shape index: {}]
  %s5 = inlined_call_operand.hbm [shape: bf16[256,896], index: 5, kind: input, shape index: {}]
  %s6 = inlined_call_operand.vmem [shape: f32[1,896], index: 6, kind: input, shape index: {}]
  %s7 = inlined_call_operand.hbm [shape: f32[16,896], index: 7, kind: output, shape index: {}]
  %s8 = sld [smem:[#allocation0]]
  $region77: #{tpu_custom_call.1} parent=0
    _
  %s10 = ssub.s32 1, %s8
  %s11 = scalar_select 0, %s10, %s8
  $region1: #{tpu_custom_call.1} parent=0
    #allocation2 [shape = 'u8[8192]{0}', space=vmem, size = 0x2000, scoped, tag = 'input window, operand 0']
    #allocation3 [shape = 's32[2]{0}', space=sflag, size = 0x8, scoped, tag = 'scoped memory for tpu_custom_call.1']
    #allocation4 [shape = 's32[2]{0}', space=sflag, size = 0x8, scoped, tag = 'scoped memory for tpu_custom_call.1']
    #allocation5 [shape = 'u8[16384]{0}', space=vmem, size = 0x4000, scoped, tag = 'input window, operand 1, single buffered']
    #allocation6 [shape = 's32[1]{0}', space=sflag, size = 0x4, scoped, tag = 'scoped memory for tpu_custom_call.1']
    #allocation7 [shape = 'u8[131072]{0}', space=vmem, size = 0x20000, scoped, tag = 'input window, operand 3, single buffered']
    #allocation8 [shape = 'u8[458752]{0}', space=vmem, size = 0x70000, scoped, tag = 'input window, operand 5, single buffered']
    #allocation9 [shape = 's32[1]{0}', space=sflag, size = 0x4, scoped, tag = 'scoped memory for tpu_custom_call.1']
    #allocation10 [shape = 'u8[57344]{0}', space=vmem, size = 0xe000, scoped, tag = 'output window, operand 0']
    %12 = vsyncpa [#allocation3], 0
    %s13 = scalar_lea.sflag [#allocation3], 1
    %14 = vsyncpa %s13, 0
    %15 = vsyncpa [#allocation6], 0
    %16 = vsyncpa [#allocation9], 0
    %17 = vsyncpa [#allocation4], 0
    %s18 = scalar_lea.sflag [#allocation4], 1
    %19 = vsyncpa %s18, 0
    loop: start=0, step=1, limit=4
    $region2: #{tpu_custom_call.1} parent=1 // loop_pre_header
      _
    $region3: #{tpu_custom_call.1} parent=1 // loop_header
      %s21 = sphi 0, %s25
      %p22 = scmp.ge.s32.totalorder %s21, 4
      %s31 = sphi 0, %s33
      %s34 = sphi 0, %s31
      %s35 = sphi 0, %s34
      %s51 = sphi 0, %s35
      %s55 = sphi 0, %s55
      %s57 = sphi 0, %s55
      %s58 = sphi 0, %s57
      %s72 = sphi 0, %s58
      %s76 = sphi 0, %s76
      %s78 = sphi 0, %s76
      %s79 = sphi 0, %s78
      %s93 = sphi 0, %s79
      %s97 = sphi 0, %s97
      %s99 = sphi 0, %s97
      %s100 = sphi 0, %s99
      %s114 = sphi 0, %s100
      %s118 = sphi 0, %s118
      %s120 = sphi 0, %s118
      %s121 = sphi 0, %s120
      %s135 = sphi 0, %s121
      %s139 = sphi 0, %s139
      %s141 = sphi 0, %s139
      %s142 = sphi 0, %s141
      %s156 = sphi 0, %s142
      %s160 = sphi 0, %s160
      %s162 = sphi 0, %s160
      %s163 = sphi 0, %s162
      %s177 = sphi 0, %s163
      %s183 = sphi 0, %s185
      %s186 = sphi 0, %s183
      %s187 = sphi 0, %s186
      %s203 = sphi 0, %s187
    $region4: #{tpu_custom_call.1} parent=1 // loop_header_branch
      %24 = sbr.rel (%p22) target = $region8
    $region5: #{tpu_custom_call.1} parent=1 // loop_body
      %s26 = ssub.s32 %s21, 1
      %s27 = ssub.s32 %s21, 2
      %s28 = sadd.s32 %s21, 1
      %s29 = ssub.s32 %s21, %s28
      %p30 = scmp.eq.s32.totalorder %s29, 0
      %s32 = sadd.s32 %s31, 1
      %s33 = scalar_select %p30, %s31, %s32
      %p36 = pneg %p30
      %p37 = scmp.eq.s32.totalorder %s21, 1
      %p38 = por %p36, %p37
      %p39 = scmp.ne.s32.totalorder %s31, %s34
      %p40 = scmp.eq.s32.totalorder %s21, 0
      %p41 = por %p39, %p40
      %p42 = scmp.ne.s32.totalorder %s31, %s34
      %p43 = scmp.eq.s32.totalorder %s26, 1
      %p44 = por %p42, %p43
      %p45 = scmp.ne.s32.totalorder %s34, %s35
      %p46 = scmp.eq.s32.totalorder %s26, 0
      %p47 = por %p45, %p46
      %p48 = scmp.ne.s32.totalorder %s34, %s35
      %p49 = scmp.eq.s32.totalorder %s27, 1
      %p50 = por %p48, %p49
      %p52 = scmp.ne.s32.totalorder %s35, %s51
      %p53 = scmp.eq.s32.totalorder %s27, 0
      %p54 = por %p52, %p53
      %s56 = sadd.s32 %s55, 1
      %p59 = scmp.eq.s32.totalorder %s21, 1
      %p60 = scmp.ne.s32.totalorder %s55, %s57
      %p61 = scmp.eq.s32.totalorder %s21, 0
      %p62 = por %p60, %p61
      %p63 = scmp.ne.s32.totalorder %s55, %s57
      %p64 = scmp.eq.s32.totalorder %s26, 1
      %p65 = por %p63, %p64
      %p66 = scmp.ne.s32.totalorder %s57, %s58
      %p67 = scmp.eq.s32.totalorder %s26, 0
      %p68 = por %p66, %p67
      %p69 = scmp.ne.s32.totalorder %s57, %s58
      %p70 = scmp.eq.s32.totalorder %s27, 1
      %p71 = por %p69, %p70
      %p73 = scmp.ne.s32.totalorder %s58, %s72
      %p74 = scmp.eq.s32.totalorder %s27, 0
      %p75 = por %p73, %p74
      %s77 = sadd.s32 %s76, 1
      %p80 = scmp.eq.s32.totalorder %s21, 1
      %p81 = scmp.ne.s32.totalorder %s76, %s78
      %p82 = scmp.eq.s32.totalorder %s21, 0
      %p83 = por %p81, %p82
      %p84 = scmp.ne.s32.totalorder %s76, %s78
      %p85 = scmp.eq.s32.totalorder %s26, 1
      %p86 = por %p84, %p85
      %p87 = scmp.ne.s32.totalorder %s78, %s79
      %p88 = scmp.eq.s32.totalorder %s26, 0
      %p89 = por %p87, %p88
      %p90 = scmp.ne.s32.totalorder %s78, %s79
      %p91 = scmp.eq.s32.totalorder %s27, 1
      %p92 = por %p90, %p91
      %p94 = scmp.ne.s32.totalorder %s79, %s93
      %p95 = scmp.eq.s32.totalorder %s27, 0
      %p96 = por %p94, %p95
      %s98 = sadd.s32 %s97, 1
      %p101 = scmp.eq.s32.totalorder %s21, 1
      %p102 = scmp.ne.s32.totalorder %s97, %s99
      %p103 = scmp.eq.s32.totalorder %s21, 0
      %p104 = por %p102, %p103
      %p105 = scmp.ne.s32.totalorder %s97, %s99
      %p106 = scmp.eq.s32.totalorder %s26, 1
      %p107 = por %p105, %p106
      %p108 = scmp.ne.s32.totalorder %s99, %s100
      %p109 = scmp.eq.s32.totalorder %s26, 0
      %p110 = por %p108, %p109
      %p111 = scmp.ne.s32.totalorder %s99, %s100
      %p112 = scmp.eq.s32.totalorder %s27, 1
      %p113 = por %p111, %p112
      %p115 = scmp.ne.s32.totalorder %s100, %s114
      %p116 = scmp.eq.s32.totalorder %s27, 0
      %p117 = por %p115, %p116
      %s119 = sadd.s32 %s118, 1
      %p122 = scmp.eq.s32.totalorder %s21, 1
      %p123 = scmp.ne.s32.totalorder %s118, %s120
      %p124 = scmp.eq.s32.totalorder %s21, 0
      %p125 = por %p123, %p124
      %p126 = scmp.ne.s32.totalorder %s118, %s120
      %p127 = scmp.eq.s32.totalorder %s26, 1
      %p128 = por %p126, %p127
      %p129 = scmp.ne.s32.totalorder %s120, %s121
      %p130 = scmp.eq.s32.totalorder %s26, 0
      %p131 = por %p129, %p130
      %p132 = scmp.ne.s32.totalorder %s120, %s121
      %p133 = scmp.eq.s32.totalorder %s27, 1
      %p134 = por %p132, %p133
      %p136 = scmp.ne.s32.totalorder %s121, %s135
      %p137 = scmp.eq.s32.totalorder %s27, 0
      %p138 = por %p136, %p137
      %s140 = sadd.s32 %s139, 1
      %p143 = scmp.eq.s32.totalorder %s21, 1
      %p144 = scmp.ne.s32.totalorder %s139, %s141
      %p145 = scmp.eq.s32.totalorder %s21, 0
      %p146 = por %p144, %p145
      %p147 = scmp.ne.s32.totalorder %s139, %s141
      %p148 = scmp.eq.s32.totalorder %s26, 1
      %p149 = por %p147, %p148
      %p150 = scmp.ne.s32.totalorder %s141, %s142
      %p151 = scmp.eq.s32.totalorder %s26, 0
      %p152 = por %p150, %p151
      %p153 = scmp.ne.s32.totalorder %s141, %s142
      %p154 = scmp.eq.s32.totalorder %s27, 1
      %p155 = por %p153, %p154
      %p157 = scmp.ne.s32.totalorder %s142, %s156
      %p158 = scmp.eq.s32.totalorder %s27, 0
      %p159 = por %p157, %p158
      %s161 = sadd.s32 %s160, 1
      %p164 = scmp.eq.s32.totalorder %s21, 1
      %p165 = scmp.ne.s32.totalorder %s160, %s162
      %p166 = scmp.eq.s32.totalorder %s21, 0
      %p167 = por %p165, %p166
      %p168 = scmp.ne.s32.totalorder %s160, %s162
      %p169 = scmp.eq.s32.totalorder %s26, 1
      %p170 = por %p168, %p169
      %p171 = scmp.ne.s32.totalorder %s162, %s163
      %p172 = scmp.eq.s32.totalorder %s26, 0
      %p173 = por %p171, %p172
      %p174 = scmp.ne.s32.totalorder %s162, %s163
      %p175 = scmp.eq.s32.totalorder %s27, 1
      %p176 = por %p174, %p175
      %p178 = scmp.ne.s32.totalorder %s163, %s177
      %p179 = scmp.eq.s32.totalorder %s27, 0
      %p180 = por %p178, %p179
      %s181 = ssub.s32 %s21, %s28
      %p182 = scmp.eq.s32.totalorder %s181, 0
      %s184 = sadd.s32 %s183, 1
      %s185 = scalar_select %p182, %s183, %s184
      %p188 = pneg %p182
      %p189 = scmp.eq.s32.totalorder %s21, 1
      %p190 = por %p188, %p189
      %p191 = scmp.ne.s32.totalorder %s183, %s186
      %p192 = scmp.eq.s32.totalorder %s21, 0
      %p193 = por %p191, %p192
      %p194 = scmp.ne.s32.totalorder %s183, %s186
      %p195 = scmp.eq.s32.totalorder %s26, 1
      %p196 = por %p194, %p195
      %p197 = scmp.ne.s32.totalorder %s186, %s187
      %p198 = scmp.eq.s32.totalorder %s26, 0
      %p199 = por %p197, %p198
      %p200 = scmp.ne.s32.totalorder %s186, %s187
      %p201 = scmp.eq.s32.totalorder %s27, 1
      %p202 = por %p200, %p201
      %p204 = scmp.ne.s32.totalorder %s187, %s203
      %p205 = scmp.eq.s32.totalorder %s27, 0
      %p206 = por %p204, %p205
      %p207 = scmp.le.s32.totalorder 1, %s21
      %p208 = scmp.lt.s32.totalorder %s21, 3
      %p209 = pnand %p207, %p208
      %p210 = pneg %p209
      // Predicated region
      $region9: #{tpu_custom_call.1} parent=5 // pred_check
        _
      $region10: #{tpu_custom_call.1} parent=5 // pred_check_branch
        %212 = sbr.rel (%p209) target = $region12
      $region11: #{tpu_custom_call.1} parent=5 // pred_region
        %s213 = ssub.s32 %s21, 1
        // Predicated region
        $region13: #{tpu_custom_call.1} parent=11 // pred_check
          %p214 = pneg %p68
        $region14: #{tpu_custom_call.1} parent=11 // pred_check_branch
          %216 = sbr.rel (%p214) target = $region16
        $region15: #{tpu_custom_call.1} parent=11 // pred_region
          %s218 = ssub.s32 512, 512
          %219 = vsyncadd [#allocation6], %s218
          %s220 = sshll.u32 [#allocation5], 4
          %s221 = int_to_ptr.vmem [resolvable:$true] %s220
          %226 = dma.hbm_to_vmem [thread:$0]  %s1, 512, %s221, [#allocation6], 128, 128, 8
        $region16: #{tpu_custom_call.1} parent=11 // pred_fallthru
          _
        // Predicated region
        $region17: #{tpu_custom_call.1} parent=11 // pred_check
          %p227 = pneg %p89
        $region18: #{tpu_custom_call.1} parent=11 // pred_check_branch
          %229 = sbr.rel (%p227) target = $region20
        $region19: #{tpu_custom_call.1} parent=11 // pred_region
          _
        $region20: #{tpu_custom_call.1} parent=11 // pred_fallthru
          _
        // Predicated region
        $region21: #{tpu_custom_call.1} parent=11 // pred_check
          %p230 = pneg %p110
        $region22: #{tpu_custom_call.1} parent=11 // pred_check_branch
          %232 = sbr.rel (%p230) target = $region24
        $region23: #{tpu_custom_call.1} parent=11 // pred_region
          %s234 = ssub.s32 4096, 4096
          %235 = vsyncadd [#allocation6], %s234
          %s236 = sshll.u32 [#allocation7], 4
          %s237 = int_to_ptr.vmem [resolvable:$true] %s236
          %242 = dma.hbm_to_vmem [thread:$0]  %s3, 4096, %s237, [#allocation6], 128, 128, 8
        $region24: #{tpu_custom_call.1} parent=11 // pred_fallthru
          _
        // Predicated region
        $region25: #{tpu_custom_call.1} parent=11 // pred_check
          %p243 = pneg %p131
        $region26: #{tpu_custom_call.1} parent=11 // pred_check_branch
          %245 = sbr.rel (%p243) target = $region28
        $region27: #{tpu_custom_call.1} parent=11 // pred_region
          _
        $region28: #{tpu_custom_call.1} parent=11 // pred_fallthru
          _
        // Predicated region
        $region29: #{tpu_custom_call.1} parent=11 // pred_check
          %p246 = pneg %p152
        $region30: #{tpu_custom_call.1} parent=11 // pred_check_branch
          %248 = sbr.rel (%p246) target = $region32
        $region31: #{tpu_custom_call.1} parent=11 // pred_region
          %s250 = ssub.s32 14336, 14336
          %251 = vsyncadd [#allocation9], %s250
          %s252 = sshll.u32 [#allocation8], 4
          %s253 = int_to_ptr.vmem [resolvable:$true] %s252
          %258 = dma.hbm_to_vmem [thread:$0]  %s5, 14336, %s253, [#allocation9], 448, 448, 28
        $region32: #{tpu_custom_call.1} parent=11 // pred_fallthru
          _
        // Predicated region
        $region33: #{tpu_custom_call.1} parent=11 // pred_check
          %p259 = pneg %p173
        $region34: #{tpu_custom_call.1} parent=11 // pred_check_branch
          %261 = sbr.rel (%p259) target = $region36
        $region35: #{tpu_custom_call.1} parent=11 // pred_region
          _
        $region36: #{tpu_custom_call.1} parent=11 // pred_fallthru
          _
      $region12: #{tpu_custom_call.1} parent=5 // pred_fallthru
        _
      %p262 = scmp.lt.s32.totalorder %s21, 2
      // Predicated region
      $region37: #{tpu_custom_call.1} parent=5 // pred_check
        %p263 = pneg %p262
      $region38: #{tpu_custom_call.1} parent=5 // pred_check_branch
        %265 = sbr.rel (%p263) target = $region40
      $region39: #{tpu_custom_call.1} parent=5 // pred_region
        // Predicated region
        $region41: #{tpu_custom_call.1} parent=39 // pred_check
          %p266 = pneg %p41
        $region42: #{tpu_custom_call.1} parent=39 // pred_check_branch
          %268 = sbr.rel (%p266) target = $region44
        $region43: #{tpu_custom_call.1} parent=39 // pred_region
          %s269 = sand.u32 %s31, 1
          %s270 = scalar_lea.sflag [#allocation3], %s269
          %s271 = sand.u32 %s31, 1
          %s272 = smul.addr %s271, 8
          %s273 = scalar_lea.vmem [#allocation2], %s272
          %s275 = ssub.s32 128, 128
          %276 = vsyncadd %s270, %s275
          %s277 = smul.addr %s21, 128
          %s278 = scalar_lea.hbm %s0, %s277
          %s280 = sshll.u32 %s273, 4
          %s281 = int_to_ptr.vmem [resolvable:$true] %s280
          %283 = dma.hbm_to_vmem [thread:$0]  %s278, 128, %s281, %s270
        $region44: #{tpu_custom_call.1} parent=39 // pred_fallthru
          _
      $region40: #{tpu_custom_call.1} parent=5 // pred_fallthru
        _
      %p284 = scmp.le.s32.totalorder 1, %s21
      %p285 = scmp.lt.s32.totalorder %s21, 3
      %p286 = pnand %p284, %p285
      %p287 = pneg %p286
      // Predicated region
      $region45: #{tpu_custom_call.1} parent=5 // pred_check
        _
      $region46: #{tpu_custom_call.1} parent=5 // pred_check_branch
        %289 = sbr.rel (%p286) target = $region48
      $region47: #{tpu_custom_call.1} parent=5 // pred_region
        %s290 = ssub.s32 %s21, 1
        %s291 = sand.u32 %s34, 1
        %s292 = scalar_lea.sflag [#allocation3], %s291
        %s293 = sand.u32 %s34, 1
        %s294 = smul.addr %s293, 8
        %s295 = scalar_lea.vmem [#allocation2], %s294
        // Predicated region
        $region49: #{tpu_custom_call.1} parent=47 // pred_check
          %p296 = pneg %p47
        $region50: #{tpu_custom_call.1} parent=47 // pred_check_branch
          %298 = sbr.rel (%p296) target = $region52
        $region51: #{tpu_custom_call.1} parent=47 // pred_region
          %299 = dma.done %s292, 128
        $region52: #{tpu_custom_call.1} parent=47 // pred_fallthru
          _
        // Predicated region
        $region53: #{tpu_custom_call.1} parent=47 // pred_check
          %p300 = pneg %p68
        $region54: #{tpu_custom_call.1} parent=47 // pred_check_branch
          %302 = sbr.rel (%p300) target = $region56
        $region55: #{tpu_custom_call.1} parent=47 // pred_region
          %303 = dma.done [#allocation6], 512
        $region56: #{tpu_custom_call.1} parent=47 // pred_fallthru
          _
        // Predicated region
        $region57: #{tpu_custom_call.1} parent=47 // pred_check
          %p304 = pneg %p110
        $region58: #{tpu_custom_call.1} parent=47 // pred_check_branch
          %306 = sbr.rel (%p304) target = $region60
        $region59: #{tpu_custom_call.1} parent=47 // pred_region
          %307 = dma.done [#allocation6], 4096
        $region60: #{tpu_custom_call.1} parent=47 // pred_fallthru
          _
        // Predicated region
        $region61: #{tpu_custom_call.1} parent=47 // pred_check
          %p308 = pneg %p152
        $region62: #{tpu_custom_call.1} parent=47 // pred_check_branch
          %310 = sbr.rel (%p308) target = $region64
        $region63: #{tpu_custom_call.1} parent=47 // pred_region
          %311 = dma.done [#allocation9], 14336
        $region64: #{tpu_custom_call.1} parent=47 // pred_fallthru
          _
        %s312 = sand.u32 %s34, 1
        %s313 = scalar_lea.sflag [#allocation3], %s312
        %s314 = sand.u32 %s34, 1
        %s315 = smul.addr %s314, 8
        %s316 = scalar_lea.vmem [#allocation2], %s315
        %p317 = pneg %p47
        %p318 = pneg %p44
        %p319 = pneg %p68
        %p320 = pneg %p65
        %p321 = pneg %p89
        %p322 = pneg %p86
        %p323 = pneg %p110
        %p324 = pneg %p107
        %p325 = pneg %p131
        %p326 = pneg %p128
        %p327 = pneg %p152
        %p328 = pneg %p149
        %p329 = pneg %p173
        %p330 = pneg %p170
        %p331 = pneg %p199
        %p332 = pneg %p196
        %s333 = sand.u32 %s186, 1
        %s334 = scalar_lea.sflag [#allocation4], %s333
        %s335 = sand.u32 %s186, 1
        %s336 = smul.addr %s335, 56
        %s337 = scalar_lea.vmem [#allocation10], %s336
        %v339 = vld [vmem:[%s295] sm:$0xff]
        %v340 = vpack.c.bf16 %v339, %v339
        %v341 = vld [vmem:[#allocation5] sm:$0xff]
        %v342 = vld [vmem:[#allocation5 + $0x8] sm:$0xff]
        %v343 = vld [vmem:[#allocation5 + $0x10] sm:$0xff]
        %v344 = vld [vmem:[#allocation5 + $0x18] sm:$0xff]
        %v345 = vld [vmem:[%s2] sm:$0x3]
        %v347 = vlaneseq
        %v348 = vshrl.u32 %v347, 7
        %v349 = vsub.s32 0, %v348
        %v350 = vrot.slane %v345, %v349
        %v351 = vlaneseq
        %v352 = vshrl.u32 %v351, 7
        %v353 = vsub.s32 1, %v352
        %v354 = vrot.slane %v345, %v353
        %v361 = vunpack.c.l.b16 %v341
        %v362 = vunpack.c.h.b16 %v341
        %v363 = vunpack.c.l.b16 %v342
        %v364 = vunpack.c.h.b16 %v342
        %v365 = vunpack.c.l.b16 %v343
        %v366 = vunpack.c.h.b16 %v343
        %v367 = vunpack.c.l.b16 %v344
        %v368 = vunpack.c.h.b16 %v344
        %v369 = vpack.c.b16 %v363, %v361
        %v370 = vpack.c.b16 %v364, %v362
        %v371 = vpack.c.b16 %v367, %v365
        %v372 = vpack.c.b16 %v368, %v366
        %vm377 = vcmask 261120
        %v379 = vsel %vm377, %v340, 0
        %381 = vmatprep.subr.bf16.mxu0 %v370
        %382 = vmatpush1.bf16.msra.mxu0 %v369
        %383 = vmatprep.subr.bf16.mxu0 %v372
        %384 = vmatpush1.bf16.msra.mxu0 %v371
        %385 = vmatprep.subr.bf16.mxu0 0
        %386 = vmatpush1.bf16.msra.mxu0 0
        %387 = vmatprep.subr.bf16.mxu0 0
        %388 = vmatpush1.bf16.msra.mxu0 0
        %389 = vmatprep.subr.bf16.mxu0 0
        %390 = vmatpush1.bf16.msra.mxu0 0
        %391 = vmatprep.subr.bf16.mxu0 0
        %392 = vmatpush1.bf16.msra.mxu0 0
        %393 = vmatprep.subr.bf16.mxu0 0
        %394 = vmatpush1.bf16.msra.mxu0 0
        %395 = vmatprep.subr.bf16.mxu0 0
        %396 = vmatpush1.bf16.msra.mxu0 0
        %397 = vmatprep.subr.bf16.mxu0 0
        %398 = vmatpush1.bf16.msra.mxu0 0
        %399 = vmatprep.subr.bf16.mxu0 0
        %400 = vmatpush1.bf16.msra.mxu0 0
        %401 = vmatprep.subr.bf16.mxu0 0
        %402 = vmatpush1.bf16.msra.mxu0 0
        %403 = vmatprep.subr.bf16.mxu0 0
        %404 = vmatpush1.bf16.msra.mxu0 0
        %405 = vmatprep.subr.bf16.mxu0 0
        %406 = vmatpush1.bf16.msra.mxu0 0
        %407 = vmatprep.subr.bf16.mxu0 0
        %408 = vmatpush1.bf16.msra.mxu0 0
        %409 = vmatprep.subr.bf16.mxu0 0
        %410 = vmatpush1.bf16.msra.mxu0 0
        %411 = vmatprep.subr.bf16.mxu0 0
        %412 = vmatpush1.bf16.msra.mxu0 0
        %413 = vmatprep.mubr.bf16.mxu0 0
        %414 = vmatmul.mubr.bf16.gmra.mrb[0].mxu0 %v379
        %v415 = vpop.f32.mrb[0].mxu0
        %v416 = vadd.f32 %v350, %v415
        %v417 = vpop.f32.mrb[0].mxu0
        %v418 = vadd.f32 %v354, %v417
        %v419 = vpop.f32.mrb[0].mxu0
        %v420 = vpop.f32.mrb[0].mxu0
        %421 = vdwg.mxu0
        %v422 = vmax.f32 %v416, 0.0
        %v423 = vmax.f32 %v418, 0.0
        %v424 = vpack.c.bf16 %v422, %v422
        %v425 = vpack.c.bf16 %v423, %v423
        %v426 = vld [vmem:[#allocation7] sm:$0xff]
        %v427 = vld [vmem:[#allocation7 + $0x8] sm:$0xff]
        %v428 = vld [vmem:[#allocation7 + $0x10] sm:$0xff]
        %v429 = vld [vmem:[#allocation7 + $0x18] sm:$0xff]
        %v430 = vld [vmem:[#allocation7 + $0x20] sm:$0xff]
        %v431 = vld [vmem:[#allocation7 + $0x28] sm:$0xff]
        %v432 = vld [vmem:[#allocation7 + $0x30] sm:$0xff]
        %v433 = vld [vmem:[#allocation7 + $0x38] sm:$0xff]
        %v434 = vld [vmem:[#allocation7 + $0x40] sm:$0xff]
        %v435 = vld [vmem:[#allocation7 + $0x48] sm:$0xff]
        %v436 = vld [vmem:[#allocation7 + $0x50] sm:$0xff]
        %v437 = vld [vmem:[#allocation7 + $0x58] sm:$0xff]
        %v438 = vld [vmem:[#allocation7 + $0x60] sm:$0xff]
        %v439 = vld [vmem:[#allocation7 + $0x68] sm:$0xff]
        %v440 = vld [vmem:[#allocation7 + $0x70] sm:$0xff]
        %v441 = vld [vmem:[#allocation7 + $0x78] sm:$0xff]
        %v442 = vld [vmem:[#allocation7 + $0x80] sm:$0xff]
        %v443 = vld [vmem:[#allocation7 + $0x88] sm:$0xff]
        %v444 = vld [vmem:[#allocation7 + $0x90] sm:$0xff]
        %v445 = vld [vmem:[#allocation7 + $0x98] sm:$0xff]
        %v446 = vld [vmem:[#allocation7 + $0xa0] sm:$0xff]
        %v447 = vld [vmem:[#allocation7 + $0xa8] sm:$0xff]
        %v448 = vld [vmem:[#allocation7 + $0xb0] sm:$0xff]
        %v449 = vld [vmem:[#allocation7 + $0xb8] sm:$0xff]
        %v450 = vld [vmem:[#allocation7 + $0xc0] sm:$0xff]
        %v451 = vld [vmem:[#allocation7 + $0xc8] sm:$0xff]
        %v452 = vld [vmem:[#allocation7 + $0xd0] sm:$0xff]
        %v453 = vld [vmem:[#allocation7 + $0xd8] sm:$0xff]
        %v454 = vld [vmem:[#allocation7 + $0xe0] sm:$0xff]
        %v455 = vld [vmem:[#allocation7 + $0xe8] sm:$0xff]
        %v456 = vld [vmem:[#allocation7 + $0xf0] sm:$0xff]
        %v457 = vld [vmem:[#allocation7 + $0xf8] sm:$0xff]
        %v458 = vld [vmem:[%s4] sm:$0x3]
        %v460 = vlaneseq
        %v461 = vshrl.u32 %v460, 7
        %v462 = vsub.s32 0, %v461
        %v463 = vrot.slane %v458, %v462
        %v464 = vlaneseq
        %v465 = vshrl.u32 %v464, 7
        %v466 = vsub.s32 1, %v465
        %v467 = vrot.slane %v458, %v466
        %v502 = vunpack.c.l.b16 %v426
        %v503 = vunpack.c.h.b16 %v426
        %v504 = vunpack.c.l.b16 %v427
        %v505 = vunpack.c.h.b16 %v427
        %v506 = vunpack.c.l.b16 %v428
        %v507 = vunpack.c.h.b16 %v428
        %v508 = vunpack.c.l.b16 %v429
        %v509 = vunpack.c.h.b16 %v429
        %v510 = vunpack.c.l.b16 %v430
        %v511 = vunpack.c.h.b16 %v430
        %v512 = vunpack.c.l.b16 %v431
        %v513 = vunpack.c.h.b16 %v431
        %v514 = vunpack.c.l.b16 %v432
        %v515 = vunpack.c.h.b16 %v432
        %v516 = vunpack.c.l.b16 %v433
        %v517 = vunpack.c.h.b16 %v433
        %v518 = vunpack.c.l.b16 %v434
        %v519 = vunpack.c.h.b16 %v434
        %v520 = vunpack.c.l.b16 %v435
        %v521 = vunpack.c.h.b16 %v435
        %v522 = vunpack.c.l.b16 %v436
        %v523 = vunpack.c.h.b16 %v436
        %v524 = vunpack.c.l.b16 %v437
        %v525 = vunpack.c.h.b16 %v437
        %v526 = vunpack.c.l.b16 %v438
        %v527 = vunpack.c.h.b16 %v438
        %v528 = vunpack.c.l.b16 %v439
        %v529 = vunpack.c.h.b16 %v439
        %v530 = vunpack.c.l.b16 %v440
        %v531 = vunpack.c.h.b16 %v440
        %v532 = vunpack.c.l.b16 %v441
        %v533 = vunpack.c.h.b16 %v441
        %v534 = vunpack.c.l.b16 %v442
        %v535 = vunpack.c.h.b16 %v442
        %v536 = vunpack.c.l.b16 %v443
        %v537 = vunpack.c.h.b16 %v443
        %v538 = vunpack.c.l.b16 %v444
        %v539 = vunpack.c.h.b16 %v444
        %v540 = vunpack.c.l.b16 %v445
        %v541 = vunpack.c.h.b16 %v445
        %v542 = vunpack.c.l.b16 %v446
        %v543 = vunpack.c.h.b16 %v446
        %v544 = vunpack.c.l.b16 %v447
        %v545 = vunpack.c.h.b16 %v447
        %v546 = vunpack.c.l.b16 %v448
        %v547 = vunpack.c.h.b16 %v448
        %v548 = vunpack.c.l.b16 %v449
        %v549 = vunpack.c.h.b16 %v449
        %v550 = vunpack.c.l.b16 %v450
        %v551 = vunpack.c.h.b16 %v450
        %v552 = vunpack.c.l.b16 %v451
        %v553 = vunpack.c.h.b16 %v451
        %v554 = vunpack.c.l.b16 %v452
        %v555 = vunpack.c.h.b16 %v452
        %v556 = vunpack.c.l.b16 %v453
        %v557 = vunpack.c.h.b16 %v453
        %v558 = vunpack.c.l.b16 %v454
        %v559 = vunpack.c.h.b16 %v454
        %v560 = vunpack.c.l.b16 %v455
        %v561 = vunpack.c.h.b16 %v455
        %v562 = vunpack.c.l.b16 %v456
        %v563 = vunpack.c.h.b16 %v456
        %v564 = vunpack.c.l.b16 %v457
        %v565 = vunpack.c.h.b16 %v457
        %v566 = vpack.c.b16 %v504, %v502
        %v567 = vpack.c.b16 %v505, %v503
        %v568 = vpack.c.b16 %v508, %v506
        %v569 = vpack.c.b16 %v509, %v507
        %v570 = vpack.c.b16 %v512, %v510
        %v571 = vpack.c.b16 %v513, %v511
        %v572 = vpack.c.b16 %v516, %v514
        %v573 = vpack.c.b16 %v517, %v515
        %v574 = vpack.c.b16 %v520, %v518
        %v575 = vpack.c.b16 %v521, %v519
        %v576 = vpack.c.b16 %v524, %v522
        %v577 = vpack.c.b16 %v525, %v523
        %v578 = vpack.c.b16 %v528, %v526
        %v579 = vpack.c.b16 %v529, %v527
        %v580 = vpack.c.b16 %v532, %v530
        %v581 = vpack.c.b16 %v533, %v531
        %v582 = vpack.c.b16 %v536, %v534
        %v583 = vpack.c.b16 %v537, %v535
        %v584 = vpack.c.b16 %v540, %v538
        %v585 = vpack.c.b16 %v541, %v539
        %v586 = vpack.c.b16 %v544, %v542
        %v587 = vpack.c.b16 %v545, %v543
        %v588 = vpack.c.b16 %v548, %v546
        %v589 = vpack.c.b16 %v549, %v547
        %v590 = vpack.c.b16 %v552, %v550
        %v591 = vpack.c.b16 %v553, %v551
        %v592 = vpack.c.b16 %v556, %v554
        %v593 = vpack.c.b16 %v557, %v555
        %v594 = vpack.c.b16 %v560, %v558
        %v595 = vpack.c.b16 %v561, %v559
        %v596 = vpack.c.b16 %v564, %v562
        %v597 = vpack.c.b16 %v565, %v563
        %630 = vmatprep.subr.bf16.mxu0 %v567
        %631 = vmatpush1.bf16.msra.mxu0 %v566
        %632 = vmatprep.subr.bf16.mxu0 %v569
        %633 = vmatpush1.bf16.msra.mxu0 %v568
        %634 = vmatprep.subr.bf16.mxu0 %v571
        %635 = vmatpush1.bf16.msra.mxu0 %v570
        %636 = vmatprep.subr.bf16.mxu0 %v573
        %637 = vmatpush1.bf16.msra.mxu0 %v572
        %638 = vmatprep.subr.bf16.mxu0 %v575
        %639 = vmatpush1.bf16.msra.mxu0 %v574
        %640 = vmatprep.subr.bf16.mxu0 %v577
        %641 = vmatpush1.bf16.msra.mxu0 %v576
        %642 = vmatprep.subr.bf16.mxu0 %v579
        %643 = vmatpush1.bf16.msra.mxu0 %v578
        %644 = vmatprep.subr.bf16.mxu0 %v581
        %645 = vmatpush1.bf16.msra.mxu0 %v580
        %646 = vmatprep.subr.bf16.mxu0 %v583
        %647 = vmatpush1.bf16.msra.mxu0 %v582
        %648 = vmatprep.subr.bf16.mxu0 %v585
        %649 = vmatpush1.bf16.msra.mxu0 %v584
        %650 = vmatprep.subr.bf16.mxu0 %v587
        %651 = vmatpush1.bf16.msra.mxu0 %v586
        %652 = vmatprep.subr.bf16.mxu0 %v589
        %653 = vmatpush1.bf16.msra.mxu0 %v588
        %654 = vmatprep.subr.bf16.mxu0 %v591
        %655 = vmatpush1.bf16.msra.mxu0 %v590
        %656 = vmatprep.subr.bf16.mxu0 %v593
        %657 = vmatpush1.bf16.msra.mxu0 %v592
        %658 = vmatprep.subr.bf16.mxu0 %v595
        %659 = vmatpush1.bf16.msra.mxu0 %v594
        %660 = vmatprep.subr.bf16.mxu0 %v597
        %661 = vmatpush1.bf16.msra.mxu0 %v596
        %662 = vmatprep.mubr.bf16.mxu0 %v425
        %663 = vmatmul.mubr.bf16.gmra.mrb[0].mxu0 %v424
        %v664 = vpop.f32.mrb[0].mxu0
        %v665 = vadd.f32 %v463, %v664
        %v666 = vpop.f32.mrb[0].mxu0
        %v667 = vadd.f32 %v467, %v666
        %v668 = vpop.f32.mrb[0].mxu0
        %v669 = vpop.f32.mrb[0].mxu0
        %670 = vdwg.mxu0
        %v671 = vmax.f32 %v665, 0.0
        %v672 = vmax.f32 %v667, 0.0
        %v673 = vpack.c.bf16 %v671, %v671
        %v674 = vpack.c.bf16 %v672, %v672
        %v675 = vld [vmem:[#allocation8] sm:$0xff]
        %v676 = vld [vmem:[#allocation8 + $0x8] sm:$0xff]
        %v677 = vld [vmem:[#allocation8 + $0x10] sm:$0xff]
        %v678 = vld [vmem:[#allocation8 + $0x18] sm:$0xf]
        %v679 = vld [vmem:[#allocation8 + $0x1c] sm:$0xff]
        %v680 = vld [vmem:[#allocation8 + $0x24] sm:$0xff]
        %v681 = vld [vmem:[#allocation8 + $0x2c] sm:$0xff]
        %v682 = vld [vmem:[#allocation8 + $0x34] sm:$0xf]
        %v683 = vld [vmem:[#allocation8 + $0x38] sm:$0xff]
        %v684 = vld [vmem:[#allocation8 + $0x40] sm:$0xff]
        %v685 = vld [vmem:[#allocation8 + $0x48] sm:$0xff]
        %v686 = vld [vmem:[#allocation8 + $0x50] sm:$0xf]
        %v687 = vld [vmem:[#allocation8 + $0x54] sm:$0xff]
        %v688 = vld [vmem:[#allocation8 + $0x5c] sm:$0xff]
        %v689 = vld [vmem:[#allocation8 + $0x64] sm:$0xff]
        %v690 = vld [vmem:[#allocation8 + $0x6c] sm:$0xf]
        %v691 = vld [vmem:[#allocation8 + $0x70] sm:$0xff]
        %v692 = vld [vmem:[#allocation8 + $0x78] sm:$0xff]
        %v693 = vld [vmem:[#allocation8 + $0x80] sm:$0xff]
        %v694 = vld [vmem:[#allocation8 + $0x88] sm:$0xf]
        %v695 = vld [vmem:[#allocation8 + $0x8c] sm:$0xff]
        %v696 = vld [vmem:[#allocation8 + $0x94] sm:$0xff]
        %v697 = vld [vmem:[#allocation8 + $0x9c] sm:$0xff]
        %v698 = vld [vmem:[#allocation8 + $0xa4] sm:$0xf]
        %v699 = vld [vmem:[#allocation8 + $0xa8] sm:$0xff]
        %v700 = vld [vmem:[#allocation8 + $0xb0] sm:$0xff]
        %v701 = vld [vmem:[#allocation8 + $0xb8] sm:$0xff]
        %v702 = vld [vmem:[#allocation8 + $0xc0] sm:$0xf]
        %v703 = vld [vmem:[#allocation8 + $0xc4] sm:$0xff]
        %v704 = vld [vmem:[#allocation8 + $0xcc] sm:$0xff]
        %v705 = vld [vmem:[#allocation8 + $0xd4] sm:$0xff]
        %v706 = vld [vmem:[#allocation8 + $0xdc] sm:$0xf]
        %v707 = vld [vmem:[#allocation8 + $0xe0] sm:$0xff]
        %v708 = vld [vmem:[#allocation8 + $0xe8] sm:$0xff]
        %v709 = vld [vmem:[#allocation8 + $0xf0] sm:$0xff]
        %v710 = vld [vmem:[#allocation8 + $0xf8] sm:$0xf]
        %v711 = vld [vmem:[#allocation8 + $0xfc] sm:$0xff]
        %v712 = vld [vmem:[#allocation8 + $0x104] sm:$0xff]
        %v713 = vld [vmem:[#allocation8 + $0x10c] sm:$0xff]
        %v714 = vld [vmem:[#allocation8 + $0x114] sm:$0xf]
        %v715 = vld [vmem:[#allocation8 + $0x118] sm:$0xff]
        %v716 = vld [vmem:[#allocation8 + $0x120] sm:$0xff]
        %v717 = vld [vmem:[#allocation8 + $0x128] sm:$0xff]
        %v718 = vld [vmem:[#allocation8 + $0x130] sm:$0xf]
        %v719 = vld [vmem:[#allocation8 + $0x134] sm:$0xff]
        %v720 = vld [vmem:[#allocation8 + $0x13c] sm:$0xff]
        %v721 = vld [vmem:[#allocation8 + $0x144] sm:$0xff]
        %v722 = vld [vmem:[#allocation8 + $0x14c] sm:$0xf]
        %v723 = vld [vmem:[#allocation8 + $0x150] sm:$0xff]
        %v724 = vld [vmem:[#allocation8 + $0x158] sm:$0xff]
        %v725 = vld [vmem:[#allocation8 + $0x160] sm:$0xff]
        %v726 = vld [vmem:[#allocation8 + $0x168] sm:$0xf]
        %v727 = vld [vmem:[#allocation8 + $0x16c] sm:$0xff]
        %v728 = vld [vmem:[#allocation8 + $0x174] sm:$0xff]
        %v729 = vld [vmem:[#allocation8 + $0x17c] sm:$0xff]
        %v730 = vld [vmem:[#allocation8 + $0x184] sm:$0xf]
        %v731 = vld [vmem:[#allocation8 + $0x188] sm:$0xff]
        %v732 = vld [vmem:[#allocation8 + $0x190] sm:$0xff]
        %v733 = vld [vmem:[#allocation8 + $0x198] sm:$0xff]
        %v734 = vld [vmem:[#allocation8 + $0x1a0] sm:$0xf]
        %v735 = vld [vmem:[#allocation8 + $0x1a4] sm:$0xff]
        %v736 = vld [vmem:[#allocation8 + $0x1ac] sm:$0xff]
        %v737 = vld [vmem:[#allocation8 + $0x1b4] sm:$0xff]
        %v738 = vld [vmem:[#allocation8 + $0x1bc] sm:$0xf]
        %v739 = vld [vmem:[#allocation8 + $0x1c0] sm:$0xff]
        %v740 = vld [vmem:[#allocation8 + $0x1c8] sm:$0xff]
        %v741 = vld [vmem:[#allocation8 + $0x1d0] sm:$0xff]
        %v742 = vld [vmem:[#allocation8 + $0x1d8] sm:$0xf]
        %v743 = vld [vmem:[#allocation8 + $0x1dc] sm:$0xff]
        %v744 = vld [vmem:[#allocation8 + $0x1e4] sm:$0xff]
        %v745 = vld [vmem:[#allocation8 + $0x1ec] sm:$0xff]
        %v746 = vld [vmem:[#allocation8 + $0x1f4] sm:$0xf]
        %v747 = vld [vmem:[#allocation8 + $0x1f8] sm:$0xff]
        %v748 = vld [vmem:[#allocation8 + $0x200] sm:$0xff]
        %v749 = vld [vmem:[#allocation8 + $0x208] sm:$0xff]
        %v750 = vld [vmem:[#allocation8 + $0x210] sm:$0xf]
        %v751 = vld [vmem:[#allocation8 + $0x214] sm:$0xff]
        %v752 = vld [vmem:[#allocation8 + $0x21c] sm:$0xff]
        %v753 = vld [vmem:[#allocation8 + $0x224] sm:$0xff]
        %v754 = vld [vmem:[#allocation8 + $0x22c] sm:$0xf]
        %v755 = vld [vmem:[#allocation8 + $0x230] sm:$0xff]
        %v756 = vld [vmem:[#allocation8 + $0x238] sm:$0xff]
        %v757 = vld [vmem:[#allocation8 + $0x240] sm:$0xff]
        %v758 = vld [vmem:[#allocation8 + $0x248] sm:$0xf]
        %v759 = vld [vmem:[#allocation8 + $0x24c] sm:$0xff]
        %v760 = vld [vmem:[#allocation8 + $0x254] sm:$0xff]
        %v761 = vld [vmem:[#allocation8 + $0x25c] sm:$0xff]
        %v762 = vld [vmem:[#allocation8 + $0x264] sm:$0xf]
        %v763 = vld [vmem:[#allocation8 + $0x268] sm:$0xff]
        %v764 = vld [vmem:[#allocation8 + $0x270] sm:$0xff]
        %v765 = vld [vmem:[#allocation8 + $0x278] sm:$0xff]
        %v766 = vld [vmem:[#allocation8 + $0x280] sm:$0xf]
        %v767 = vld [vmem:[#allocation8 + $0x284] sm:$0xff]
        %v768 = vld [vmem:[#allocation8 + $0x28c] sm:$0xff]
        %v769 = vld [vmem:[#allocation8 + $0x294] sm:$0xff]
        %v770 = vld [vmem:[#allocation8 + $0x29c] sm:$0xf]
        %v771 = vld [vmem:[#allocation8 + $0x2a0] sm:$0xff]
        %v772 = vld [vmem:[#allocation8 + $0x2a8] sm:$0xff]
        %v773 = vld [vmem:[#allocation8 + $0x2b0] sm:$0xff]
        %v774 = vld [vmem:[#allocation8 + $0x2b8] sm:$0xf]
        %v775 = vld [vmem:[#allocation8 + $0x2bc] sm:$0xff]
        %v776 = vld [vmem:[#allocation8 + $0x2c4] sm:$0xff]
        %v777 = vld [vmem:[#allocation8 + $0x2cc] sm:$0xff]
        %v778 = vld [vmem:[#allocation8 + $0x2d4] sm:$0xf]
        %v779 = vld [vmem:[#allocation8 + $0x2d8] sm:$0xff]
        %v780 = vld [vmem:[#allocation8 + $0x2e0] sm:$0xff]
        %v781 = vld [vmem:[#allocation8 + $0x2e8] sm:$0xff]
        %v782 = vld [vmem:[#allocation8 + $0x2f0] sm:$0xf]
        %v783 = vld [vmem:[#allocation8 + $0x2f4] sm:$0xff]
        %v784 = vld [vmem:[#allocation8 + $0x2fc] sm:$0xff]
        %v785 = vld [vmem:[#allocation8 + $0x304] sm:$0xff]
        %v786 = vld [vmem:[#allocation8 + $0x30c] sm:$0xf]
        %v787 = vld [vmem:[#allocation8 + $0x310] sm:$0xff]
        %v788 = vld [vmem:[#allocation8 + $0x318] sm:$0xff]
        %v789 = vld [vmem:[#allocation8 + $0x320] sm:$0xff]
        %v790 = vld [vmem:[#allocation8 + $0x328] sm:$0xf]
        %v791 = vld [vmem:[#allocation8 + $0x32c] sm:$0xff]
        %v792 = vld [vmem:[#allocation8 + $0x334] sm:$0xff]
        %v793 = vld [vmem:[#allocation8 + $0x33c] sm:$0xff]
        %v794 = vld [vmem:[#allocation8 + $0x344] sm:$0xf]
        %v795 = vld [vmem:[#allocation8 + $0x348] sm:$0xff]
        %v796 = vld [vmem:[#allocation8 + $0x350] sm:$0xff]
        %v797 = vld [vmem:[#allocation8 + $0x358] sm:$0xff]
        %v798 = vld [vmem:[#allocation8 + $0x360] sm:$0xf]
        %v799 = vld [vmem:[#allocation8 + $0x364] sm:$0xff]
        %v800 = vld [vmem:[#allocation8 + $0x36c] sm:$0xff]
        %v801 = vld [vmem:[#allocation8 + $0x374] sm:$0xff]
        %v802 = vld [vmem:[#allocation8 + $0x37c] sm:$0xf]
        %v803 = vld [vmem:[%s6] sm:$0xff]
        %v805 = vlaneseq
        %v806 = vshrl.u32 %v805, 7
        %v807 = vsub.s32 0, %v806
        %v808 = vrot.slane %v803, %v807
        %v809 = vlaneseq
        %v810 = vshrl.u32 %v809, 7
        %v811 = vsub.s32 1, %v810
        %v812 = vrot.slane %v803, %v811
        %v813 = vlaneseq
        %v814 = vshrl.u32 %v813, 7
        %v815 = vsub.s32 2, %v814
        %v816 = vrot.slane %v803, %v815
        %v817 = vlaneseq
        %v818 = vshrl.u32 %v817, 7
        %v819 = vsub.s32 3, %v818
        %v820 = vrot.slane %v803, %v819
        %v821 = vlaneseq
        %v822 = vshrl.u32 %v821, 7
        %v823 = vsub.s32 4, %v822
        %v824 = vrot.slane %v803, %v823
        %v825 = vlaneseq
        %v826 = vshrl.u32 %v825, 7
        %v827 = vsub.s32 5, %v826
        %v828 = vrot.slane %v803, %v827
        %v829 = vlaneseq
        %v830 = vshrl.u32 %v829, 7
        %v831 = vsub.s32 6, %v830
        %v832 = vrot.slane %v803, %v831
        %v968 = vunpack.c.l.b16 %v675
        %v969 = vunpack.c.h.b16 %v675
        %v970 = vunpack.c.l.b16 %v676
        %v971 = vunpack.c.h.b16 %v676
        %v972 = vunpack.c.l.b16 %v677
        %v973 = vunpack.c.h.b16 %v677
        %v974 = vunpack.c.l.b16 %v678
        %v975 = vunpack.c.l.b16 %v679
        %v976 = vunpack.c.h.b16 %v679
        %v977 = vunpack.c.l.b16 %v680
        %v978 = vunpack.c.h.b16 %v680
        %v979 = vunpack.c.l.b16 %v681
        %v980 = vunpack.c.h.b16 %v681
        %v981 = vunpack.c.l.b16 %v682
        %v982 = vunpack.c.l.b16 %v683
        %v983 = vunpack.c.h.b16 %v683
        %v984 = vunpack.c.l.b16 %v684
        %v985 = vunpack.c.h.b16 %v684
        %v986 = vunpack.c.l.b16 %v685
        %v987 = vunpack.c.h.b16 %v685
        %v988 = vunpack.c.l.b16 %v686
        %v989 = vunpack.c.l.b16 %v687
        %v990 = vunpack.c.h.b16 %v687
        %v991 = vunpack.c.l.b16 %v688
        %v992 = vunpack.c.h.b16 %v688
        %v993 = vunpack.c.l.b16 %v689
        %v994 = vunpack.c.h.b16 %v689
        %v995 = vunpack.c.l.b16 %v690
        %v996 = vunpack.c.l.b16 %v691
        %v997 = vunpack.c.h.b16 %v691
        %v998 = vunpack.c.l.b16 %v692
        %v999 = vunpack.c.h.b16 %v692
        %v1000 = vunpack.c.l.b16 %v693
        %v1001 = vunpack.c.h.b16 %v693
        %v1002 = vunpack.c.l.b16 %v694
        %v1003 = vunpack.c.l.b16 %v695
        %v1004 = vunpack.c.h.b16 %v695
        %v1005 = vunpack.c.l.b16 %v696
        %v1006 = vunpack.c.h.b16 %v696
        %v1007 = vunpack.c.l.b16 %v697
        %v1008 = vunpack.c.h.b16 %v697
        %v1009 = vunpack.c.l.b16 %v698
        %v1010 = vunpack.c.l.b16 %v699
        %v1011 = vunpack.c.h.b16 %v699
        %v1012 = vunpack.c.l.b16 %v700
        %v1013 = vunpack.c.h.b16 %v700
        %v1014 = vunpack.c.l.b16 %v701
        %v1015 = vunpack.c.h.b16 %v701
        %v1016 = vunpack.c.l.b16 %v702
        %v1017 = vunpack.c.l.b16 %v703
        %v1018 = vunpack.c.h.b16 %v703
        %v1019 = vunpack.c.l.b16 %v704
        %v1020 = vunpack.c.h.b16 %v704
        %v1021 = vunpack.c.l.b16 %v705
        %v1022 = vunpack.c.h.b16 %v705
        %v1023 = vunpack.c.l.b16 %v706
        %v1024 = vunpack.c.l.b16 %v707
        %v1025 = vunpack.c.h.b16 %v707
        %v1026 = vunpack.c.l.b16 %v708
        %v1027 = vunpack.c.h.b16 %v708
        %v1028 = vunpack.c.l.b16 %v709
        %v1029 = vunpack.c.h.b16 %v709
        %v1030 = vunpack.c.l.b16 %v710
        %v1031 = vunpack.c.l.b16 %v711
        %v1032 = vunpack.c.h.b16 %v711
        %v1033 = vunpack.c.l.b16 %v712
        %v1034 = vunpack.c.h.b16 %v712
        %v1035 = vunpack.c.l.b16 %v713
        %v1036 = vunpack.c.h.b16 %v713
        %v1037 = vunpack.c.l.b16 %v714
        %v1038 = vunpack.c.l.b16 %v715
        %v1039 = vunpack.c.h.b16 %v715
        %v1040 = vunpack.c.l.b16 %v716
        %v1041 = vunpack.c.h.b16 %v716
        %v1042 = vunpack.c.l.b16 %v717
        %v1043 = vunpack.c.h.b16 %v717
        %v1044 = vunpack.c.l.b16 %v718
        %v1045 = vunpack.c.l.b16 %v719
        %v1046 = vunpack.c.h.b16 %v719
        %v1047 = vunpack.c.l.b16 %v720
        %v1048 = vunpack.c.h.b16 %v720
        %v1049 = vunpack.c.l.b16 %v721
        %v1050 = vunpack.c.h.b16 %v721
        %v1051 = vunpack.c.l.b16 %v722
        %v1052 = vunpack.c.l.b16 %v723
        %v1053 = vunpack.c.h.b16 %v723
        %v1054 = vunpack.c.l.b16 %v724
        %v1055 = vunpack.c.h.b16 %v724
        %v1056 = vunpack.c.l.b16 %v725
        %v1057 = vunpack.c.h.b16 %v725
        %v1058 = vunpack.c.l.b16 %v726
        %v1059 = vunpack.c.l.b16 %v727
        %v1060 = vunpack.c.h.b16 %v727
        %v1061 = vunpack.c.l.b16 %v728
        %v1062 = vunpack.c.h.b16 %v728
        %v1063 = vunpack.c.l.b16 %v729
        %v1064 = vunpack.c.h.b16 %v729
        %v1065 = vunpack.c.l.b16 %v730
        %v1066 = vunpack.c.l.b16 %v731
        %v1067 = vunpack.c.h.b16 %v731
        %v1068 = vunpack.c.l.b16 %v732
        %v1069 = vunpack.c.h.b16 %v732
        %v1070 = vunpack.c.l.b16 %v733
        %v1071 = vunpack.c.h.b16 %v733
        %v1072 = vunpack.c.l.b16 %v734
        %v1073 = vunpack.c.l.b16 %v735
        %v1074 = vunpack.c.h.b16 %v735
        %v1075 = vunpack.c.l.b16 %v736
        %v1076 = vunpack.c.h.b16 %v736
        %v1077 = vunpack.c.l.b16 %v737
        %v1078 = vunpack.c.h.b16 %v737
        %v1079 = vunpack.c.l.b16 %v738
        %v1080 = vunpack.c.l.b16 %v739
        %v1081 = vunpack.c.h.b16 %v739
        %v1082 = vunpack.c.l.b16 %v740
        %v1083 = vunpack.c.h.b16 %v740
        %v1084 = vunpack.c.l.b16 %v741
        %v1085 = vunpack.c.h.b16 %v741
        %v1086 = vunpack.c.l.b16 %v742
        %v1087 = vunpack.c.l.b16 %v743
        %v1088 = vunpack.c.h.b16 %v743
        %v1089 = vunpack.c.l.b16 %v744
        %v1090 = vunpack.c.h.b16 %v744
        %v1091 = vunpack.c.l.b16 %v745
        %v1092 = vunpack.c.h.b16 %v745
        %v1093 = vunpack.c.l.b16 %v746
        %v1094 = vunpack.c.l.b16 %v747
        %v1095 = vunpack.c.h.b16 %v747
        %v1096 = vunpack.c.l.b16 %v748
        %v1097 = vunpack.c.h.b16 %v748
        %v1098 = vunpack.c.l.b16 %v749
        %v1099 = vunpack.c.h.b16 %v749
        %v1100 = vunpack.c.l.b16 %v750
        %v1101 = vunpack.c.l.b16 %v751
        %v1102 = vunpack.c.h.b16 %v751
        %v1103 = vunpack.c.l.b16 %v752
        %v1104 = vunpack.c.h.b16 %v752
        %v1105 = vunpack.c.l.b16 %v753
        %v1106 = vunpack.c.h.b16 %v753
        %v1107 = vunpack.c.l.b16 %v754
        %v1108 = vunpack.c.l.b16 %v755
        %v1109 = vunpack.c.h.b16 %v755
        %v1110 = vunpack.c.l.b16 %v756
        %v1111 = vunpack.c.h.b16 %v756
        %v1112 = vunpack.c.l.b16 %v757
        %v1113 = vunpack.c.h.b16 %v757
        %v1114 = vunpack.c.l.b16 %v758
        %v1115 = vunpack.c.l.b16 %v759
        %v1116 = vunpack.c.h.b16 %v759
        %v1117 = vunpack.c.l.b16 %v760
        %v1118 = vunpack.c.h.b16 %v760
        %v1119 = vunpack.c.l.b16 %v761
        %v1120 = vunpack.c.h.b16 %v761
        %v1121 = vunpack.c.l.b16 %v762
        %v1122 = vunpack.c.l.b16 %v763
        %v1123 = vunpack.c.h.b16 %v763
        %v1124 = vunpack.c.l.b16 %v764
        %v1125 = vunpack.c.h.b16 %v764
        %v1126 = vunpack.c.l.b16 %v765
        %v1127 = vunpack.c.h.b16 %v765
        %v1128 = vunpack.c.l.b16 %v766
        %v1129 = vunpack.c.l.b16 %v767
        %v1130 = vunpack.c.h.b16 %v767
        %v1131 = vunpack.c.l.b16 %v768
        %v1132 = vunpack.c.h.b16 %v768
        %v1133 = vunpack.c.l.b16 %v769
        %v1134 = vunpack.c.h.b16 %v769
        %v1135 = vunpack.c.l.b16 %v770
        %v1136 = vunpack.c.l.b16 %v771
        %v1137 = vunpack.c.h.b16 %v771
        %v1138 = vunpack.c.l.b16 %v772
        %v1139 = vunpack.c.h.b16 %v772
        %v1140 = vunpack.c.l.b16 %v773
        %v1141 = vunpack.c.h.b16 %v773
        %v1142 = vunpack.c.l.b16 %v774
        %v1143 = vunpack.c.l.b16 %v775
        %v1144 = vunpack.c.h.b16 %v775
        %v1145 = vunpack.c.l.b16 %v776
        %v1146 = vunpack.c.h.b16 %v776
        %v1147 = vunpack.c.l.b16 %v777
        %v1148 = vunpack.c.h.b16 %v777
        %v1149 = vunpack.c.l.b16 %v778
        %v1150 = vunpack.c.l.b16 %v779
        %v1151 = vunpack.c.h.b16 %v779
        %v1152 = vunpack.c.l.b16 %v780
        %v1153 = vunpack.c.h.b16 %v780
        %v1154 = vunpack.c.l.b16 %v781
        %v1155 = vunpack.c.h.b16 %v781
        %v1156 = vunpack.c.l.b16 %v782
        %v1157 = vunpack.c.l.b16 %v783
        %v1158 = vunpack.c.h.b16 %v783
        %v1159 = vunpack.c.l.b16 %v784
        %v1160 = vunpack.c.h.b16 %v784
        %v1161 = vunpack.c.l.b16 %v785
        %v1162 = vunpack.c.h.b16 %v785
        %v1163 = vunpack.c.l.b16 %v786
        %v1164 = vunpack.c.l.b16 %v787
        %v1165 = vunpack.c.h.b16 %v787
        %v1166 = vunpack.c.l.b16 %v788
        %v1167 = vunpack.c.h.b16 %v788
        %v1168 = vunpack.c.l.b16 %v789
        %v1169 = vunpack.c.h.b16 %v789
        %v1170 = vunpack.c.l.b16 %v790
        %v1171 = vunpack.c.l.b16 %v791
        %v1172 = vunpack.c.h.b16 %v791
        %v1173 = vunpack.c.l.b16 %v792
        %v1174 = vunpack.c.h.b16 %v792
        %v1175 = vunpack.c.l.b16 %v793
        %v1176 = vunpack.c.h.b16 %v793
        %v1177 = vunpack.c.l.b16 %v794
        %v1178 = vunpack.c.l.b16 %v795
        %v1179 = vunpack.c.h.b16 %v795
        %v1180 = vunpack.c.l.b16 %v796
        %v1181 = vunpack.c.h.b16 %v796
        %v1182 = vunpack.c.l.b16 %v797
        %v1183 = vunpack.c.h.b16 %v797
        %v1184 = vunpack.c.l.b16 %v798
        %v1185 = vunpack.c.l.b16 %v799
        %v1186 = vunpack.c.h.b16 %v799
        %v1187 = vunpack.c.l.b16 %v800
        %v1188 = vunpack.c.h.b16 %v800
        %v1189 = vunpack.c.l.b16 %v801
        %v1190 = vunpack.c.h.b16 %v801
        %v1191 = vunpack.c.l.b16 %v802
        %v1192 = vpack.c.b16 %v975, %v968
        %v1193 = vpack.c.b16 %v976, %v969
        %v1194 = vpack.c.b16 %v977, %v970
        %v1195 = vpack.c.b16 %v978, %v971
        %v1196 = vpack.c.b16 %v979, %v972
        %v1197 = vpack.c.b16 %v980, %v973
        %v1198 = vpack.c.b16 %v981, %v974
        %v1199 = vpack.c.b16 %v989, %v982
        %v1200 = vpack.c.b16 %v990, %v983
        %v1201 = vpack.c.b16 %v991, %v984
        %v1202 = vpack.c.b16 %v992, %v985
        %v1203 = vpack.c.b16 %v993, %v986
        %v1204 = vpack.c.b16 %v994, %v987
        %v1205 = vpack.c.b16 %v995, %v988
        %v1206 = vpack.c.b16 %v1003, %v996
        %v1207 = vpack.c.b16 %v1004, %v997
        %v1208 = vpack.c.b16 %v1005, %v998
        %v1209 = vpack.c.b16 %v1006, %v999
        %v1210 = vpack.c.b16 %v1007, %v1000
        %v1211 = vpack.c.b16 %v1008, %v1001
        %v1212 = vpack.c.b16 %v1009, %v1002
        %v1213 = vpack.c.b16 %v1017, %v1010
        %v1214 = vpack.c.b16 %v1018, %v1011
        %v1215 = vpack.c.b16 %v1019, %v1012
        %v1216 = vpack.c.b16 %v1020, %v1013
        %v1217 = vpack.c.b16 %v1021, %v1014
        %v1218 = vpack.c.b16 %v1022, %v1015
        %v1219 = vpack.c.b16 %v1023, %v1016
        %v1220 = vpack.c.b16 %v1031, %v1024
        %v1221 = vpack.c.b16 %v1032, %v1025
        %v1222 = vpack.c.b16 %v1033, %v1026
        %v1223 = vpack.c.b16 %v1034, %v1027
        %v1224 = vpack.c.b16 %v1035, %v1028
        %v1225 = vpack.c.b16 %v1036, %v1029
        %v1226 = vpack.c.b16 %v1037, %v1030
        %v1227 = vpack.c.b16 %v1045, %v1038
        %v1228 = vpack.c.b16 %v1046, %v1039
        %v1229 = vpack.c.b16 %v1047, %v1040
        %v1230 = vpack.c.b16 %v1048, %v1041
        %v1231 = vpack.c.b16 %v1049, %v1042
        %v1232 = vpack.c.b16 %v1050, %v1043
        %v1233 = vpack.c.b16 %v1051, %v1044
        %v1234 = vpack.c.b16 %v1059, %v1052
        %v1235 = vpack.c.b16 %v1060, %v1053
        %v1236 = vpack.c.b16 %v1061, %v1054
        %v1237 = vpack.c.b16 %v1062, %v1055
        %v1238 = vpack.c.b16 %v1063, %v1056
        %v1239 = vpack.c.b16 %v1064, %v1057
        %v1240 = vpack.c.b16 %v1065, %v1058
        %v1241 = vpack.c.b16 %v1073, %v1066
        %v1242 = vpack.c.b16 %v1074, %v1067
        %v1243 = vpack.c.b16 %v1075, %v1068
        %v1244 = vpack.c.b16 %v1076, %v1069
        %v1245 = vpack.c.b16 %v1077, %v1070
        %v1246 = vpack.c.b16 %v1078, %v1071
        %v1247 = vpack.c.b16 %v1079, %v1072
        %v1248 = vpack.c.b16 %v1087, %v1080
        %v1249 = vpack.c.b16 %v1088, %v1081
        %v1250 = vpack.c.b16 %v1089, %v1082
        %v1251 = vpack.c.b16 %v1090, %v1083
        %v1252 = vpack.c.b16 %v1091, %v1084
        %v1253 = vpack.c.b16 %v1092, %v1085
        %v1254 = vpack.c.b16 %v1093, %v1086
        %v1255 = vpack.c.b16 %v1101, %v1094
        %v1256 = vpack.c.b16 %v1102, %v1095
        %v1257 = vpack.c.b16 %v1103, %v1096
        %v1258 = vpack.c.b16 %v1104, %v1097
        %v1259 = vpack.c.b16 %v1105, %v1098
        %v1260 = vpack.c.b16 %v1106, %v1099
        %v1261 = vpack.c.b16 %v1107, %v1100
        %v1262 = vpack.c.b16 %v1115, %v1108
        %v1263 = vpack.c.b16 %v1116, %v1109
        %v1264 = vpack.c.b16 %v1117, %v1110
        %v1265 = vpack.c.b16 %v1118, %v1111
        %v1266 = vpack.c.b16 %v1119, %v1112
        %v1267 = vpack.c.b16 %v1120, %v1113
        %v1268 = vpack.c.b16 %v1121, %v1114
        %v1269 = vpack.c.b16 %v1129, %v1122
        %v1270 = vpack.c.b16 %v1130, %v1123
        %v1271 = vpack.c.b16 %v1131, %v1124
        %v1272 = vpack.c.b16 %v1132, %v1125
        %v1273 = vpack.c.b16 %v1133, %v1126
        %v1274 = vpack.c.b16 %v1134, %v1127
        %v1275 = vpack.c.b16 %v1135, %v1128
        %v1276 = vpack.c.b16 %v1143, %v1136
        %v1277 = vpack.c.b16 %v1144, %v1137
        %v1278 = vpack.c.b16 %v1145, %v1138
        %v1279 = vpack.c.b16 %v1146, %v1139
        %v1280 = vpack.c.b16 %v1147, %v1140
        %v1281 = vpack.c.b16 %v1148, %v1141
        %v1282 = vpack.c.b16 %v1149, %v1142
        %v1283 = vpack.c.b16 %v1157, %v1150
        %v1284 = vpack.c.b16 %v1158, %v1151
        %v1285 = vpack.c.b16 %v1159, %v1152
        %v1286 = vpack.c.b16 %v1160, %v1153
        %v1287 = vpack.c.b16 %v1161, %v1154
        %v1288 = vpack.c.b16 %v1162, %v1155
        %v1289 = vpack.c.b16 %v1163, %v1156
        %v1290 = vpack.c.b16 %v1171, %v1164
        %v1291 = vpack.c.b16 %v1172, %v1165
        %v1292 = vpack.c.b16 %v1173, %v1166
        %v1293 = vpack.c.b16 %v1174, %v1167
        %v1294 = vpack.c.b16 %v1175, %v1168
        %v1295 = vpack.c.b16 %v1176, %v1169
        %v1296 = vpack.c.b16 %v1177, %v1170
        %v1297 = vpack.c.b16 %v1185, %v1178
        %v1298 = vpack.c.b16 %v1186, %v1179
        %v1299 = vpack.c.b16 %v1187, %v1180
        %v1300 = vpack.c.b16 %v1188, %v1181
        %v1301 = vpack.c.b16 %v1189, %v1182
        %v1302 = vpack.c.b16 %v1190, %v1183
        %v1303 = vpack.c.b16 %v1191, %v1184
        %1416 = vmatprep.subr.bf16.mxu0 %v1193
        %1417 = vmatpush1.bf16.msra.mxu0 %v1192
        %1418 = vmatprep.subr.bf16.mxu0 %v1200
        %1419 = vmatpush1.bf16.msra.mxu0 %v1199
        %1420 = vmatprep.subr.bf16.mxu0 %v1207
        %1421 = vmatpush1.bf16.msra.mxu0 %v1206
        %1422 = vmatprep.subr.bf16.mxu0 %v1214
        %1423 = vmatpush1.bf16.msra.mxu0 %v1213
        %1424 = vmatprep.subr.bf16.mxu0 %v1221
        %1425 = vmatpush1.bf16.msra.mxu0 %v1220
        %1426 = vmatprep.subr.bf16.mxu0 %v1228
        %1427 = vmatpush1.bf16.msra.mxu0 %v1227
        %1428 = vmatprep.subr.bf16.mxu0 %v1235
        %1429 = vmatpush1.bf16.msra.mxu0 %v1234
        %1430 = vmatprep.subr.bf16.mxu0 %v1242
        %1431 = vmatpush1.bf16.msra.mxu0 %v1241
        %1432 = vmatprep.subr.bf16.mxu0 %v1249
        %1433 = vmatpush1.bf16.msra.mxu0 %v1248
        %1434 = vmatprep.subr.bf16.mxu0 %v1256
        %1435 = vmatpush1.bf16.msra.mxu0 %v1255
        %1436 = vmatprep.subr.bf16.mxu0 %v1263
        %1437 = vmatpush1.bf16.msra.mxu0 %v1262
        %1438 = vmatprep.subr.bf16.mxu0 %v1270
        %1439 = vmatpush1.bf16.msra.mxu0 %v1269
        %1440 = vmatprep.subr.bf16.mxu0 %v1277
        %1441 = vmatpush1.bf16.msra.mxu0 %v1276
        %1442 = vmatprep.subr.bf16.mxu0 %v1284
        %1443 = vmatpush1.bf16.msra.mxu0 %v1283
        %1444 = vmatprep.subr.bf16.mxu0 %v1291
        %1445 = vmatpush1.bf16.msra.mxu0 %v1290
        %1446 = vmatprep.subr.bf16.mxu0 %v1298
        %1447 = vmatpush1.bf16.msra.mxu0 %v1297
        %1448 = vmatprep.mubr.bf16.mxu0 %v674
        %1449 = vmatmul.mubr.bf16.gmra.mrb[0].mxu0 %v673
        %v1450 = vpop.f32.mrb[0].mxu0
        %v1451 = vadd.f32 %v808, %v1450
        %v1452 = vpop.f32.mrb[0].mxu0
        %v1453 = vadd.f32 %v812, %v1452
        %v1454 = vpop.f32.mrb[0].mxu0
        %v1455 = vpop.f32.mrb[0].mxu0
        %1456 = vdwg.mxu0
        %1457 = vmatprep.subr.bf16.mxu0 %v1195
        %1458 = vmatpush1.bf16.msra.mxu0 %v1194
        %1459 = vmatprep.subr.bf16.mxu0 %v1202
        %1460 = vmatpush1.bf16.msra.mxu0 %v1201
        %1461 = vmatprep.subr.bf16.mxu0 %v1209
        %1462 = vmatpush1.bf16.msra.mxu0 %v1208
        %1463 = vmatprep.subr.bf16.mxu0 %v1216
        %1464 = vmatpush1.bf16.msra.mxu0 %v1215
        %1465 = vmatprep.subr.bf16.mxu0 %v1223
        %1466 = vmatpush1.bf16.msra.mxu0 %v1222
        %1467 = vmatprep.subr.bf16.mxu0 %v1230
        %1468 = vmatpush1.bf16.msra.mxu0 %v1229
        %1469 = vmatprep.subr.bf16.mxu0 %v1237
        %1470 = vmatpush1.bf16.msra.mxu0 %v1236
        %1471 = vmatprep.subr.bf16.mxu0 %v1244
        %1472 = vmatpush1.bf16.msra.mxu0 %v1243
        %1473 = vmatprep.subr.bf16.mxu0 %v1251
        %1474 = vmatpush1.bf16.msra.mxu0 %v1250
        %1475 = vmatprep.subr.bf16.mxu0 %v1258
        %1476 = vmatpush1.bf16.msra.mxu0 %v1257
        %1477 = vmatprep.subr.bf16.mxu0 %v1265
        %1478 = vmatpush1.bf16.msra.mxu0 %v1264
        %1479 = vmatprep.subr.bf16.mxu0 %v1272
        %1480 = vmatpush1.bf16.msra.mxu0 %v1271
        %1481 = vmatprep.subr.bf16.mxu0 %v1279
        %1482 = vmatpush1.bf16.msra.mxu0 %v1278
        %1483 = vmatprep.subr.bf16.mxu0 %v1286
        %1484 = vmatpush1.bf16.msra.mxu0 %v1285
        %1485 = vmatprep.subr.bf16.mxu0 %v1293
        %1486 = vmatpush1.bf16.msra.mxu0 %v1292
        %1487 = vmatprep.subr.bf16.mxu0 %v1300
        %1488 = vmatpush1.bf16.msra.mxu0 %v1299
        %1489 = vmatprep.mubr.bf16.mxu0 %v674
        %1490 = vmatmul.mubr.bf16.gmra.mrb[0].mxu0 %v673
        %v1491 = vpop.f32.mrb[0].mxu0
        %v1492 = vadd.f32 %v816, %v1491
        %v1493 = vpop.f32.mrb[0].mxu0
        %v1494 = vadd.f32 %v820, %v1493
        %v1495 = vpop.f32.mrb[0].mxu0
        %v1496 = vpop.f32.mrb[0].mxu0
        %1497 = vdwg.mxu0
        %1498 = vmatprep.subr.bf16.mxu0 %v1197
        %1499 = vmatpush1.bf16.msra.mxu0 %v1196
        %1500 = vmatprep.subr.bf16.mxu0 %v1204
        %1501 = vmatpush1.bf16.msra.mxu0 %v1203
        %1502 = vmatprep.subr.bf16.mxu0 %v1211
        %1503 = vmatpush1.bf16.msra.mxu0 %v1210
        %1504 = vmatprep.subr.bf16.mxu0 %v1218
        %1505 = vmatpush1.bf16.msra.mxu0 %v1217
        %1506 = vmatprep.subr.bf16.mxu0 %v1225
        %1507 = vmatpush1.bf16.msra.mxu0 %v1224
        %1508 = vmatprep.subr.bf16.mxu0 %v1232
        %1509 = vmatpush1.bf16.msra.mxu0 %v1231
        %1510 = vmatprep.subr.bf16.mxu0 %v1239
        %1511 = vmatpush1.bf16.msra.mxu0 %v1238
        %1512 = vmatprep.subr.bf16.mxu0 %v1246
        %1513 = vmatpush1.bf16.msra.mxu0 %v1245
        %1514 = vmatprep.subr.bf16.mxu0 %v1253
        %1515 = vmatpush1.bf16.msra.mxu0 %v1252
        %1516 = vmatprep.subr.bf16.mxu0 %v1260
        %1517 = vmatpush1.bf16.msra.mxu0 %v1259
        %1518 = vmatprep.subr.bf16.mxu0 %v1267
        %1519 = vmatpush1.bf16.msra.mxu0 %v1266
        %1520 = vmatprep.subr.bf16.mxu0 %v1274
        %1521 = vmatpush1.bf16.msra.mxu0 %v1273
        %1522 = vmatprep.subr.bf16.mxu0 %v1281
        %1523 = vmatpush1.bf16.msra.mxu0 %v1280
        %1524 = vmatprep.subr.bf16.mxu0 %v1288
        %1525 = vmatpush1.bf16.msra.mxu0 %v1287
        %1526 = vmatprep.subr.bf16.mxu0 %v1295
        %1527 = vmatpush1.bf16.msra.mxu0 %v1294
        %1528 = vmatprep.subr.bf16.mxu0 %v1302
        %1529 = vmatpush1.bf16.msra.mxu0 %v1301
        %1530 = vmatprep.mubr.bf16.mxu0 %v674
        %1531 = vmatmul.mubr.bf16.gmra.mrb[0].mxu0 %v673
        %v1532 = vpop.f32.mrb[0].mxu0
        %v1533 = vadd.f32 %v824, %v1532
        %v1534 = vpop.f32.mrb[0].mxu0
        %v1535 = vadd.f32 %v828, %v1534
        %v1536 = vpop.f32.mrb[0].mxu0
        %v1537 = vpop.f32.mrb[0].mxu0
        %1538 = vdwg.mxu0
        %1539 = vmatprep.subr.bf16.mxu0 0
        %1540 = vmatpush1.bf16.msra.mxu0 %v1198
        %1541 = vmatprep.subr.bf16.mxu0 0
        %1542 = vmatpush1.bf16.msra.mxu0 %v1205
        %1543 = vmatprep.subr.bf16.mxu0 0
        %1544 = vmatpush1.bf16.msra.mxu0 %v1212
        %1545 = vmatprep.subr.bf16.mxu0 0
        %1546 = vmatpush1.bf16.msra.mxu0 %v1219
        %1547 = vmatprep.subr.bf16.mxu0 0
        %1548 = vmatpush1.bf16.msra.mxu0 %v1226
        %1549 = vmatprep.subr.bf16.mxu0 0
        %1550 = vmatpush1.bf16.msra.mxu0 %v1233
        %1551 = vmatprep.subr.bf16.mxu0 0
        %1552 = vmatpush1.bf16.msra.mxu0 %v1240
        %1553 = vmatprep.subr.bf16.mxu0 0
        %1554 = vmatpush1.bf16.msra.mxu0 %v1247
        %1555 = vmatprep.subr.bf16.mxu0 0
        %1556 = vmatpush1.bf16.msra.mxu0 %v1254
        %1557 = vmatprep.subr.bf16.mxu0 0
        %1558 = vmatpush1.bf16.msra.mxu0 %v1261
        %1559 = vmatprep.subr.bf16.mxu0 0
        %1560 = vmatpush1.bf16.msra.mxu0 %v1268
        %1561 = vmatprep.subr.bf16.mxu0 0
        %1562 = vmatpush1.bf16.msra.mxu0 %v1275
        %1563 = vmatprep.subr.bf16.mxu0 0
        %1564 = vmatpush1.bf16.msra.mxu0 %v1282
        %1565 = vmatprep.subr.bf16.mxu0 0
        %1566 = vmatpush1.bf16.msra.mxu0 %v1289
        %1567 = vmatprep.subr.bf16.mxu0 0
        %1568 = vmatpush1.bf16.msra.mxu0 %v1296
        %1569 = vmatprep.subr.bf16.mxu0 0
        %1570 = vmatpush1.bf16.msra.mxu0 %v1303
        %1571 = vmatprep.mubr.bf16.mxu0 %v674
        %1572 = vmatmul.mubr.bf16.gmra.mrb[0].mxu0 %v673
        %v1573 = vpop.f32.mrb[0].mxu0
        %v1574 = vadd.f32 %v832, %v1573
        %v1575 = vpop.f32.mrb[0].mxu0
        %v1576 = vpop.f32.mrb[0].mxu0
        %v1577 = vpop.f32.mrb[0].mxu0
        %1578 = vdwg.mxu0
        %v1579 = vtanh.pop %v1451
        %v1580 = vtanh.pop %v1453
        %v1581 = vtanh.pop %v1492
        %v1582 = vtanh.pop %v1494
        %v1583 = vtanh.pop %v1533
        %v1584 = vtanh.pop %v1535
        %v1585 = vtanh.pop %v1574
        %v1586 = vmul.f32 %v1579, 0.5
        %v1587 = vmul.f32 %v1580, 0.5
        %v1588 = vmul.f32 %v1581, 0.5
        %v1589 = vmul.f32 %v1582, 0.5
        %v1590 = vmul.f32 %v1583, 0.5
        %v1591 = vmul.f32 %v1584, 0.5
        %v1592 = vmul.f32 %v1585, 0.5
        %v1593 = vadd.f32 %v1586, 0.5
        %v1594 = vadd.f32 %v1587, 0.5
        %v1595 = vadd.f32 %v1588, 0.5
        %v1596 = vadd.f32 %v1589, 0.5
        %v1597 = vadd.f32 %v1590, 0.5
        %v1598 = vadd.f32 %v1591, 0.5
        %v1599 = vadd.f32 %v1592, 0.5
        %1600 = vst [vmem:[%s337] sm:$0xff] %v1593
        %1601 = vst [vmem:[%s337 + $0x8] sm:$0xff] %v1594
        %1602 = vst [vmem:[%s337 + $0x10] sm:$0xff] %v1595
        %1603 = vst [vmem:[%s337 + $0x18] sm:$0xff] %v1596
        %1604 = vst [vmem:[%s337 + $0x20] sm:$0xff] %v1597
        %1605 = vst [vmem:[%s337 + $0x28] sm:$0xff] %v1598
        %1606 = vst [vmem:[%s337 + $0x30] sm:$0xff] %v1599
        %s1607 = sand.u32 %s186, 1
        %s1608 = scalar_lea.sflag [#allocation4], %s1607
        %s1609 = sand.u32 %s186, 1
        %s1610 = smul.addr %s1609, 56
        %s1611 = scalar_lea.vmem [#allocation10], %s1610
        // Predicated region
        $region65: #{tpu_custom_call.1} parent=47 // pred_check
          %p1612 = pneg %p196
        $region66: #{tpu_custom_call.1} parent=47 // pred_check_branch
          %1614 = sbr.rel (%p1612) target = $region68
        $region67: #{tpu_custom_call.1} parent=47 // pred_region
          %s1616 = ssub.s32 896, 896
          %1617 = vsyncadd %s1608, %s1616
          %s1618 = smul.addr %s26, 7
          %s1619 = smul.addr %s1618, 128
          %s1620 = scalar_lea.hbm %s7, %s1619
          %s1622 = sshll.u32 %s1611, 4
          %s1623 = int_to_ptr.vmem [resolvable:$true] %s1622
          %1625 = dma.vmem_to_hbm [thread:$0]  %s1623, 896, %s1620, %s1608
        $region68: #{tpu_custom_call.1} parent=47 // pred_fallthru
          _
      $region48: #{tpu_custom_call.1} parent=5 // pred_fallthru
        _
      %p1626 = scmp.le.s32.totalorder 2, %s21
      // Predicated region
      $region69: #{tpu_custom_call.1} parent=5 // pred_check
        %p1627 = pneg %p1626
      $region70: #{tpu_custom_call.1} parent=5 // pred_check_branch
        %1629 = sbr.rel (%p1627) target = $region72
      $region71: #{tpu_custom_call.1} parent=5 // pred_region
        %s1630 = ssub.s32 %s21, 2
        // Predicated region
        $region73: #{tpu_custom_call.1} parent=71 // pred_check
          %p1631 = pneg %p202
        $region74: #{tpu_custom_call.1} parent=71 // pred_check_branch
          %1633 = sbr.rel (%p1631) target = $region76
        $region75: #{tpu_custom_call.1} parent=71 // pred_region
          %s1634 = sand.u32 %s187, 1
          %s1635 = scalar_lea.sflag [#allocation4], %s1634
          %s1636 = sand.u32 %s187, 1
          %s1637 = smul.addr %s1636, 56
          %s1638 = scalar_lea.vmem [#allocation10], %s1637
          %1639 = dma.done %s1635, 896
        $region76: #{tpu_custom_call.1} parent=71 // pred_fallthru
          _
      $region72: #{tpu_custom_call.1} parent=5 // pred_fallthru
        _
    $region6: #{tpu_custom_call.1} parent=1 // loop_footer
      %s25 = sadd.s32 1, %s21
    $region7: #{tpu_custom_call.1} parent=1 // loop_footer_branch
      %20 = sbr.rel target = $region3
    $region8: #{tpu_custom_call.1} parent=1 // loop_exit
      _
    %1640 = vsyncpa [#allocation3], 1
    %s1641 = scalar_lea.sflag [#allocation3], 1
    %1642 = vsyncpa %s1641, 1
    %1643 = vsyncpa [#allocation6], 1
    %1644 = vsyncpa [#allocation9], 1
    %1645 = vsyncpa [#allocation4], 1
    %s1646 = scalar_lea.sflag [#allocation4], 1
    %1647 = vsyncpa %s1646, 1

</llo_original>
